<compile_context>
chip_gen: v7x
topology: tpu7x:2x2x1
jax: 0.10.0
libtpu: 0.0.40
codegen_flags: <defaults>
</compile_context>

<pallas_src>
import jax
import jax.numpy as jnp
from jax.experimental import pallas as pl
from jax.experimental.pallas import tpu as pltpu

H1 = 400     # logical layer-1 width (nn.Linear(., 400))
H2 = 300     # logical layer-2 width
H1P = 512    # padded, lane-aligned layer-1 width
H2P = 384    # padded, lane-aligned layer-2 width


def _critic_kernel(s_ref, a_ref,
                   w14s_ref, w14a_ref, b14_ref,
                   w2_ref, b2_ref, w5_ref, b5_ref,
                   w36_ref, b36_ref,
                   q_ref):
    s = s_ref[...].astype(jnp.bfloat16)
    a = a_ref[...].astype(jnp.bfloat16)

    # Fused layer 1 for both heads; K split as state@Ws + action@Wa (no concat).
    acc1 = (jnp.dot(s, w14s_ref[...], preferred_element_type=jnp.float32)
            + jnp.dot(a, w14a_ref[...], preferred_element_type=jnp.float32))
    # Fused bias + ReLU + bf16 cast per head: only the bf16 layer-1
    # activations are materialized (no separate full-width f32 ReLU result).
    h1 = jnp.maximum(acc1[:, :H1P] + b14_ref[:, :H1P], 0.0).astype(jnp.bfloat16)
    g1 = jnp.maximum(acc1[:, H1P:] + b14_ref[:, H1P:], 0.0).astype(jnp.bfloat16)

    # Layer 2 (different inputs per head -> two matmuls), bf16 epilogue fused.
    h2 = jnp.maximum(
        jnp.dot(h1, w2_ref[...], preferred_element_type=jnp.float32) + b2_ref[...],
        0.0).astype(jnp.bfloat16)
    g2 = jnp.maximum(
        jnp.dot(g1, w5_ref[...], preferred_element_type=jnp.float32) + b5_ref[...],
        0.0).astype(jnp.bfloat16)

    # Layer 3: block-diagonal [2*H2P, 2] weight addressed via static ref
    # slices (free) instead of a lane-dim concat of h2|g2.
    # col 0 = q1, col 1 = q2.
    q = (jnp.dot(h2, w36_ref[:H2P, :], preferred_element_type=jnp.float32)
         + jnp.dot(g2, w36_ref[H2P:, :], preferred_element_type=jnp.float32)
         + b36_ref[...])
    q_ref[...] = q.astype(q_ref.dtype)


def _pad2(w, rows, cols):
    r, c = w.shape
    return jnp.pad(w, ((0, rows - r), (0, cols - c)))


def _pad1(b, n):
    return jnp.pad(b, (0, n - b.shape[0]))


def pack_params(params, state_dim):
    """Pad / fuse the six PyTorch-style (W:(in,out), b:(out,)) layers into the
    kernel's packed, bf16, lane-aligned layout."""
    (w1, b1), (w2, b2), (w3, b3), (w4, b4), (w5, b5), (w6, b6) = params
    in_dim = w1.shape[0]

    # Layer 1 of both heads fused along N, then split along K (state | action).
    w14 = jnp.concatenate([_pad2(w1, in_dim, H1P), _pad2(w4, in_dim, H1P)], axis=1)
    w14s = w14[:state_dim].astype(jnp.bfloat16)        # [state_dim, 2*H1P]
    w14a = w14[state_dim:].astype(jnp.bfloat16)        # [action_dim, 2*H1P]
    b14 = jnp.concatenate([_pad1(b1, H1P), _pad1(b4, H1P)]).reshape(1, -1)
    b14 = b14.astype(jnp.float32)                      # [1, 2*H1P]

    w2p = _pad2(w2, H1P, H2P).astype(jnp.bfloat16)     # [H1P, H2P]
    b2p = _pad1(b2, H2P).reshape(1, -1).astype(jnp.float32)
    w5p = _pad2(w5, H1P, H2P).astype(jnp.bfloat16)
    b5p = _pad1(b5, H2P).reshape(1, -1).astype(jnp.float32)

    # Block-diagonal final layer: [2*H2P, 2], col 0 <- w3, col 1 <- w6.
    w36 = jnp.zeros((2 * H2P, 2), jnp.float32)
    w36 = w36.at[:H2, 0].set(w3[:, 0]).at[H2P:H2P + H2, 1].set(w6[:, 0])
    w36 = w36.astype(jnp.bfloat16)
    b36 = jnp.stack([b3[0], b6[0]]).reshape(1, 2).astype(jnp.float32)

    return (w14s, w14a, b14, w2p, b2p, w5p, b5p, w36, b36)


def _round_up(x, m):
    return ((x + m - 1) // m) * m


def _choose_tb(B):
    """Batch-tile size: bf16-sublane aligned (>=16), >= 2 grid steps whenever
    the batch permits (so v7x's second TensorCore gets work), capped at 1024
    rows so the per-tile working set (~15 MiB) fits v7x's 64 MiB VMEM with
    headroom; v5e/v6e (128 MiB) are also fine."""
    if B <= 128:
        return _round_up(B, 16)
    if B <= 512:
        return _round_up(pl.cdiv(B, 2), 128)
    return min(1024, _round_up(pl.cdiv(B, 2), 256))


@jax.jit
def critic_forward(state, action, packed):
    """Returns (q1, q2), each [B, 1] f32, matching Critic.forward."""
    B, state_dim = state.shape
    action_dim = action.shape[1]
    (w14s, w14a, b14, w2p, b2p, w5p, b5p, w36, b36) = packed

    tb = _choose_tb(B)
    grid = (pl.cdiv(B, tb),)

    batch_map = lambda i: (i, 0)
    const_map = lambda i: (0, 0)

    def wspec(arr):
        # Constant index_map -> block stays VMEM-resident across all tiles.
        return pl.BlockSpec(arr.shape, const_map)

    in_specs = [
        pl.BlockSpec((tb, state_dim), batch_map),
        pl.BlockSpec((tb, action_dim), batch_map),
        wspec(w14s), wspec(w14a), wspec(b14),
        wspec(w2p), wspec(b2p), wspec(w5p), wspec(b5p),
        wspec(w36), wspec(b36),
    ]
    out_spec = pl.BlockSpec((tb, 2), batch_map)

    in_dim = state_dim + action_dim
    flops = 2 * B * (in_dim * 2 * H1P + 2 * H1P * H2P + 2 * H2P * 2)
    weight_bytes = sum(int(w.size) * w.dtype.itemsize
                       for w in (w14s, w14a, b14, w2p, b2p, w5p, b5p, w36, b36))
    bytes_accessed = (int(state.size) * 4 + int(action.size) * 4
                      + B * 2 * 4 + weight_bytes)

    q = pl.pallas_call(
        _critic_kernel,
        out_shape=jax.ShapeDtypeStruct((B, 2), jnp.float32),
        grid=grid,
        in_specs=in_specs,
        out_specs=out_spec,
        compiler_params=pltpu.CompilerParams(
            dimension_semantics=("parallel",),
            # Headroom for 1024-row tiles; actual per-tile use is ~15 MiB,
            # well under any generation's physical VMEM.
            vmem_limit_bytes=64 << 20),
        cost_estimate=pl.CostEstimate(
            flops=int(flops), transcendentals=0,
            bytes_accessed=int(bytes_accessed)),
    )(state, action, w14s, w14a, b14, w2p, b2p, w5p, b5p, w36, b36)

    return q[:, 0:1], q[:, 1:2]


def init_params(key, state_dim, action_dim):
    """Deterministic init mirroring PyTorch Linear shapes, stored as (in, out)."""
    in_dim = state_dim + action_dim
    dims = [(in_dim, H1), (H1, H2), (H2, 1),
            (in_dim, H1), (H1, H2), (H2, 1)]
    params = []
    for i, (fan_in, fan_out) in enumerate(dims):
        kw, kb = jax.random.split(jax.random.fold_in(key, i))
        bound = 1.0 / (fan_in ** 0.5)
        w = jax.random.uniform(kw, (fan_in, fan_out), jnp.float32, -bound, bound)
        b = jax.random.uniform(kb, (fan_out,), jnp.float32, -bound, bound)
        params.append((w, b))
    return params


def _reference(state, action, params):
    x = jnp.concatenate([state, action], axis=1)
    (w1, b1), (w2, b2), (w3, b3), (w4, b4), (w5, b5), (w6, b6) = params
    h = jnp.maximum(x @ w1 + b1, 0.0)
    h = jnp.maximum(h @ w2 + b2, 0.0)
    q1 = h @ w3 + b3
    g = jnp.maximum(x @ w4 + b4, 0.0)
    g = jnp.maximum(g @ w5 + b5, 0.0)
    q2 = g @ w6 + b6
    return q1, q2


if __name__ == "__main__":
    key = jax.random.PRNGKey(0)
    B, state_dim, action_dim = 2, 8, 4

    k_s, k_a, k_p = jax.random.split(key, 3)
    state = jax.random.normal(k_s, (B, state_dim), jnp.float32)
    action = jax.random.normal(k_a, (B, action_dim), jnp.float32)
    params = init_params(k_p, state_dim, action_dim)
    packed = pack_params(params, state_dim)

    q1, q2 = critic_forward(state, action, packed)
    q1 = jax.block_until_ready(q1)
    q2 = jax.block_until_ready(q2)

    r1, r2 = _reference(state, action, params)
    assert q1.shape == (B, 1) and q2.shape == (B, 1)
    # bf16 matmul operands -> loosened tolerance vs. the fp32 reference.
    assert jnp.allclose(q1, r1, atol=5e-2, rtol=5e-2)
    assert jnp.allclose(q2, r2, atol=5e-2, rtol=5e-2)

    print("KERNEL_OK")
</pallas_src>

<mosaic_0001>
module attributes {stable_mosaic.version = 11 : i64} {
  func.func @_critic_kernel(%arg0: i32, %arg1: memref<16x8xf32, #tpu.memory_space<vmem>>, %arg2: memref<16x4xf32, #tpu.memory_space<vmem>>, %arg3: memref<8x1024xbf16, #tpu.memory_space<vmem>>, %arg4: memref<4x1024xbf16, #tpu.memory_space<vmem>>, %arg5: memref<1x1024xf32, #tpu.memory_space<vmem>>, %arg6: memref<512x384xbf16, #tpu.memory_space<vmem>>, %arg7: memref<1x384xf32, #tpu.memory_space<vmem>>, %arg8: memref<512x384xbf16, #tpu.memory_space<vmem>>, %arg9: memref<1x384xf32, #tpu.memory_space<vmem>>, %arg10: memref<768x2xbf16, #tpu.memory_space<vmem>>, %arg11: memref<1x2xf32, #tpu.memory_space<vmem>>, %arg12: memref<16x2xf32, #tpu.memory_space<vmem>>) attributes {dimension_semantics = [#tpu.dimension_semantics<parallel>], iteration_bounds = array<i64: 1>, scalar_prefetch = 0 : i64, scratch_operands = 0 : i64, tpu.core_type = #tpu.core_type<tc>, window_params = [{transform_indices = @transform_0, window_bounds = array<i64: 16, 8>}, {transform_indices = @transform_1, window_bounds = array<i64: 16, 4>}, {pipeline_mode = #tpu.pipeline_mode<synchronous>, transform_indices = @transform_2, window_bounds = array<i64: 8, 1024>}, {pipeline_mode = #tpu.pipeline_mode<synchronous>, transform_indices = @transform_3, window_bounds = array<i64: 4, 1024>}, {pipeline_mode = #tpu.pipeline_mode<synchronous>, transform_indices = @transform_4, window_bounds = array<i64: 1, 1024>}, {pipeline_mode = #tpu.pipeline_mode<synchronous>, transform_indices = @transform_5, window_bounds = array<i64: 512, 384>}, {pipeline_mode = #tpu.pipeline_mode<synchronous>, transform_indices = @transform_6, window_bounds = array<i64: 1, 384>}, {pipeline_mode = #tpu.pipeline_mode<synchronous>, transform_indices = @transform_7, window_bounds = array<i64: 512, 384>}, {pipeline_mode = #tpu.pipeline_mode<synchronous>, transform_indices = @transform_8, window_bounds = array<i64: 1, 384>}, {pipeline_mode = #tpu.pipeline_mode<synchronous>, transform_indices = @transform_9, window_bounds = array<i64: 768, 2>}, {pipeline_mode = #tpu.pipeline_mode<synchronous>, transform_indices = @transform_10, window_bounds = array<i64: 1, 2>}, {transform_indices = @transform_11, window_bounds = array<i64: 16, 2>}]} {
    %c0 = arith.constant 0 : index
    %c0_0 = arith.constant 0 : index
    %0 = vector.load %arg1[%c0, %c0_0] : memref<16x8xf32, #tpu.memory_space<vmem>>, vector<16x8xf32>
    %1 = arith.truncf %0 : vector<16x8xf32> to vector<16x8xbf16>
    %c0_1 = arith.constant 0 : index
    %c0_2 = arith.constant 0 : index
    %2 = vector.load %arg2[%c0_1, %c0_2] : memref<16x4xf32, #tpu.memory_space<vmem>>, vector<16x4xf32>
    %3 = arith.truncf %2 : vector<16x4xf32> to vector<16x4xbf16>
    %c0_3 = arith.constant 0 : index
    %c0_4 = arith.constant 0 : index
    %4 = vector.load %arg3[%c0_3, %c0_4] : memref<8x1024xbf16, #tpu.memory_space<vmem>>, vector<8x1024xbf16>
    %cst = arith.constant dense<0.000000e+00> : vector<16x1024xf32>
    %5 = tpu.matmul %1, %4, %cst {dimension_numbers = #tpu.dot_dimension_numbers<[1], [0], [0], [1], [0, 0, 1, 1], [], []>} : vector<16x8xbf16>, vector<8x1024xbf16>, vector<16x1024xf32> -> vector<16x1024xf32>
    %c0_5 = arith.constant 0 : index
    %c0_6 = arith.constant 0 : index
    %6 = vector.load %arg4[%c0_5, %c0_6] : memref<4x1024xbf16, #tpu.memory_space<vmem>>, vector<4x1024xbf16>
    %cst_7 = arith.constant dense<0.000000e+00> : vector<16x1024xf32>
    %7 = tpu.matmul %3, %6, %cst_7 {dimension_numbers = #tpu.dot_dimension_numbers<[1], [0], [0], [1], [0, 0, 1, 1], [], []>} : vector<16x4xbf16>, vector<4x1024xbf16>, vector<16x1024xf32> -> vector<16x1024xf32>
    %8 = arith.addf %5, %7 : vector<16x1024xf32>
    %9 = vector.extract_strided_slice %8 {offsets = [0, 0], sizes = [16, 512], strides = [1, 1]} : vector<16x1024xf32> to vector<16x512xf32>
    %c0_8 = arith.constant 0 : index
    %c0_9 = arith.constant 0 : index
    %10 = vector.load %arg5[%c0_8, %c0_9] : memref<1x1024xf32, #tpu.memory_space<vmem>>, vector<1x512xf32>
    %11 = vector.broadcast %10 : vector<1x512xf32> to vector<16x512xf32>
    %12 = arith.addf %9, %11 : vector<16x512xf32>
    %cst_10 = arith.constant 0.000000e+00 : f32
    %13 = vector.broadcast %cst_10 : f32 to vector<16x512xf32>
    %14 = arith.maximumf %12, %13 : vector<16x512xf32>
    %15 = arith.truncf %14 : vector<16x512xf32> to vector<16x512xbf16>
    %16 = vector.extract_strided_slice %8 {offsets = [0, 512], sizes = [16, 512], strides = [1, 1]} : vector<16x1024xf32> to vector<16x512xf32>
    %c0_11 = arith.constant 0 : index
    %c512 = arith.constant 512 : index
    %17 = vector.load %arg5[%c0_11, %c512] : memref<1x1024xf32, #tpu.memory_space<vmem>>, vector<1x512xf32>
    %18 = vector.broadcast %17 : vector<1x512xf32> to vector<16x512xf32>
    %19 = arith.addf %16, %18 : vector<16x512xf32>
    %cst_12 = arith.constant 0.000000e+00 : f32
    %20 = vector.broadcast %cst_12 : f32 to vector<16x512xf32>
    %21 = arith.maximumf %19, %20 : vector<16x512xf32>
    %22 = arith.truncf %21 : vector<16x512xf32> to vector<16x512xbf16>
    %c0_13 = arith.constant 0 : index
    %c0_14 = arith.constant 0 : index
    %23 = vector.load %arg6[%c0_13, %c0_14] : memref<512x384xbf16, #tpu.memory_space<vmem>>, vector<512x384xbf16>
    %cst_15 = arith.constant dense<0.000000e+00> : vector<16x384xf32>
    %24 = tpu.matmul %15, %23, %cst_15 {dimension_numbers = #tpu.dot_dimension_numbers<[1], [0], [0], [1], [0, 0, 1, 1], [], []>} : vector<16x512xbf16>, vector<512x384xbf16>, vector<16x384xf32> -> vector<16x384xf32>
    %c0_16 = arith.constant 0 : index
    %c0_17 = arith.constant 0 : index
    %25 = vector.load %arg7[%c0_16, %c0_17] : memref<1x384xf32, #tpu.memory_space<vmem>>, vector<1x384xf32>
    %26 = vector.broadcast %25 : vector<1x384xf32> to vector<16x384xf32>
    %27 = arith.addf %24, %26 : vector<16x384xf32>
    %cst_18 = arith.constant 0.000000e+00 : f32
    %28 = vector.broadcast %cst_18 : f32 to vector<16x384xf32>
    %29 = arith.maximumf %27, %28 : vector<16x384xf32>
    %30 = arith.truncf %29 : vector<16x384xf32> to vector<16x384xbf16>
    %c0_19 = arith.constant 0 : index
    %c0_20 = arith.constant 0 : index
    %31 = vector.load %arg8[%c0_19, %c0_20] : memref<512x384xbf16, #tpu.memory_space<vmem>>, vector<512x384xbf16>
    %cst_21 = arith.constant dense<0.000000e+00> : vector<16x384xf32>
    %32 = tpu.matmul %22, %31, %cst_21 {dimension_numbers = #tpu.dot_dimension_numbers<[1], [0], [0], [1], [0, 0, 1, 1], [], []>} : vector<16x512xbf16>, vector<512x384xbf16>, vector<16x384xf32> -> vector<16x384xf32>
    %c0_22 = arith.constant 0 : index
    %c0_23 = arith.constant 0 : index
    %33 = vector.load %arg9[%c0_22, %c0_23] : memref<1x384xf32, #tpu.memory_space<vmem>>, vector<1x384xf32>
    %34 = vector.broadcast %33 : vector<1x384xf32> to vector<16x384xf32>
    %35 = arith.addf %32, %34 : vector<16x384xf32>
    %cst_24 = arith.constant 0.000000e+00 : f32
    %36 = vector.broadcast %cst_24 : f32 to vector<16x384xf32>
    %37 = arith.maximumf %35, %36 : vector<16x384xf32>
    %38 = arith.truncf %37 : vector<16x384xf32> to vector<16x384xbf16>
    %c0_25 = arith.constant 0 : index
    %c0_26 = arith.constant 0 : index
    %39 = vector.load %arg10[%c0_25, %c0_26] : memref<768x2xbf16, #tpu.memory_space<vmem>>, vector<384x2xbf16>
    %cst_27 = arith.constant dense<0.000000e+00> : vector<16x2xf32>
    %40 = tpu.matmul %30, %39, %cst_27 {dimension_numbers = #tpu.dot_dimension_numbers<[1], [0], [0], [1], [0, 0, 1, 1], [], []>} : vector<16x384xbf16>, vector<384x2xbf16>, vector<16x2xf32> -> vector<16x2xf32>
    %c384 = arith.constant 384 : index
    %c0_28 = arith.constant 0 : index
    %41 = vector.load %arg10[%c384, %c0_28] : memref<768x2xbf16, #tpu.memory_space<vmem>>, vector<384x2xbf16>
    %cst_29 = arith.constant dense<0.000000e+00> : vector<16x2xf32>
    %42 = tpu.matmul %38, %41, %cst_29 {dimension_numbers = #tpu.dot_dimension_numbers<[1], [0], [0], [1], [0, 0, 1, 1], [], []>} : vector<16x384xbf16>, vector<384x2xbf16>, vector<16x2xf32> -> vector<16x2xf32>
    %43 = arith.addf %40, %42 : vector<16x2xf32>
    %c0_30 = arith.constant 0 : index
    %c0_31 = arith.constant 0 : index
    %44 = vector.load %arg11[%c0_30, %c0_31] : memref<1x2xf32, #tpu.memory_space<vmem>>, vector<1x2xf32>
    %45 = vector.broadcast %44 : vector<1x2xf32> to vector<16x2xf32>
    %46 = arith.addf %43, %45 : vector<16x2xf32>
    %c0_32 = arith.constant 0 : index
    %c0_33 = arith.constant 0 : index
    %47 = vector.load %arg12[%c0_32, %c0_33] : memref<16x2xf32, #tpu.memory_space<vmem>>, vector<16x2xf32>
    tpu.vector_store %arg12[%c0_32, %c0_33], %46 {strides = array<i32>} : memref<16x2xf32, #tpu.memory_space<vmem>>, vector<16x2xf32>,
    return
  }
  func.func @transform_0(%arg0: i32) -> (i32, i32) {
    %c0_i32 = arith.constant 0 : i32
    %c0_i32_0 = arith.constant 0 : i32
    return %arg0, %c0_i32 : i32, i32
  }
  func.func @transform_1(%arg0: i32) -> (i32, i32) {
    %c0_i32 = arith.constant 0 : i32
    %c0_i32_0 = arith.constant 0 : i32
    return %arg0, %c0_i32 : i32, i32
  }
  func.func @transform_2(%arg0: i32) -> (i32, i32) {
    %c0_i32 = arith.constant 0 : i32
    %c0_i32_0 = arith.constant 0 : i32
    %c0_i32_1 = arith.constant 0 : i32
    return %c0_i32, %c0_i32_0 : i32, i32
  }
  func.func @transform_3(%arg0: i32) -> (i32, i32) {
    %c0_i32 = arith.constant 0 : i32
    %c0_i32_0 = arith.constant 0 : i32
    %c0_i32_1 = arith.constant 0 : i32
    return %c0_i32, %c0_i32_0 : i32, i32
  }
  func.func @transform_4(%arg0: i32) -> (i32, i32) {
    %c0_i32 = arith.constant 0 : i32
    %c0_i32_0 = arith.constant 0 : i32
    %c0_i32_1 = arith.constant 0 : i32
    return %c0_i32, %c0_i32_0 : i32, i32
  }
  func.func @transform_5(%arg0: i32) -> (i32, i32) {
    %c0_i32 = arith.constant 0 : i32
    %c0_i32_0 = arith.constant 0 : i32
    %c0_i32_1 = arith.constant 0 : i32
    return %c0_i32, %c0_i32_0 : i32, i32
  }
  func.func @transform_6(%arg0: i32) -> (i32, i32) {
    %c0_i32 = arith.constant 0 : i32
    %c0_i32_0 = arith.constant 0 : i32
    %c0_i32_1 = arith.constant 0 : i32
    return %c0_i32, %c0_i32_0 : i32, i32
  }
  func.func @transform_7(%arg0: i32) -> (i32, i32) {
    %c0_i32 = arith.constant 0 : i32
    %c0_i32_0 = arith.constant 0 : i32
    %c0_i32_1 = arith.constant 0 : i32
    return %c0_i32, %c0_i32_0 : i32, i32
  }
  func.func @transform_8(%arg0: i32) -> (i32, i32) {
    %c0_i32 = arith.constant 0 : i32
    %c0_i32_0 = arith.constant 0 : i32
    %c0_i32_1 = arith.constant 0 : i32
    return %c0_i32, %c0_i32_0 : i32, i32
  }
  func.func @transform_9(%arg0: i32) -> (i32, i32) {
    %c0_i32 = arith.constant 0 : i32
    %c0_i32_0 = arith.constant 0 : i32
    %c0_i32_1 = arith.constant 0 : i32
    return %c0_i32, %c0_i32_0 : i32, i32
  }
  func.func @transform_10(%arg0: i32) -> (i32, i32) {
    %c0_i32 = arith.constant 0 : i32
    %c0_i32_0 = arith.constant 0 : i32
    %c0_i32_1 = arith.constant 0 : i32
    return %c0_i32, %c0_i32_0 : i32, i32
  }
  func.func @transform_11(%arg0: i32) -> (i32, i32) {
    %c0_i32 = arith.constant 0 : i32
    %c0_i32_0 = arith.constant 0 : i32
    return %arg0, %c0_i32 : i32, i32
  }
}

</mosaic_0001>

<llo_original>
// kernel: critic_forward.1
$region0: #{critic_forward.1}
  #allocation0 [shape = 'u32[]', space=smem, size = 0x4, offset = 0x4, fixed_abs, tag = 'smem constant byte address 0x4 - core index']
  #allocation1 [shape = 'u32[144,128]{1,0:T(1,128)}', space=vmem, size = 0x12000, scoped, tag = 'internal scratch']
  %s0 = inlined_call_operand.hbm [shape: f32[2,8], index: 0, kind: input, shape index: {}]
  %s1 = inlined_call_operand.hbm [shape: f32[2,4], index: 1, kind: input, shape index: {}]
  %s2 = inlined_call_operand.hbm [shape: bf16[8,1024], index: 2, kind: input, shape index: {}]
  %s3 = inlined_call_operand.hbm [shape: bf16[4,1024], index: 3, kind: input, shape index: {}]
  %s4 = inlined_call_operand.hbm [shape: f32[1,1024], index: 4, kind: input, shape index: {}]
  %s5 = inlined_call_operand.hbm [shape: bf16[512,384], index: 5, kind: input, shape index: {}]
  %s6 = inlined_call_operand.hbm [shape: f32[1,384], index: 6, kind: input, shape index: {}]
  %s7 = inlined_call_operand.hbm [shape: bf16[512,384], index: 7, kind: input, shape index: {}]
  %s8 = inlined_call_operand.hbm [shape: f32[1,384], index: 8, kind: input, shape index: {}]
  %s9 = inlined_call_operand.hbm [shape: bf16[768,2], index: 9, kind: input, shape index: {}]
  %s10 = inlined_call_operand.hbm [shape: f32[1,2], index: 10, kind: input, shape index: {}]
  %s11 = inlined_call_operand.hbm [shape: f32[2,2], index: 11, kind: output, shape index: {}]
  %s12 = sld [smem:[#allocation0]]
  $region98: #{critic_forward.1} parent=0
    _
  %s14 = ssub.s32 1, %s12
  %s15 = scalar_select 0, %s14, %s12
  $region1: #{critic_forward.1} parent=0
    #allocation2 [shape = 'u8[8192]{0}', space=vmem, size = 0x2000, scoped, tag = 'input window, operand 0, single buffered']
    #allocation3 [shape = 's32[1]{0}', space=sflag, size = 0x4, scoped, tag = 'scoped memory for critic_forward.1']
    #allocation4 [shape = 's32[1]{0}', space=sflag, size = 0x4, scoped, tag = 'scoped memory for critic_forward.1']
    #allocation5 [shape = 'u8[8192]{0}', space=vmem, size = 0x2000, scoped, tag = 'input window, operand 1, single buffered']
    #allocation6 [shape = 's32[1]{0}', space=sflag, size = 0x4, scoped, tag = 'scoped memory for critic_forward.1']
    #allocation7 [shape = 'u8[16384]{0}', space=vmem, size = 0x4000, scoped, tag = 'input window, operand 2, single buffered']
    #allocation8 [shape = 'u8[8192]{0}', space=vmem, size = 0x2000, scoped, tag = 'input window, operand 3, single buffered']
    #allocation9 [shape = 's32[1]{0}', space=sflag, size = 0x4, scoped, tag = 'scoped memory for critic_forward.1']
    #allocation10 [shape = 'u8[4096]{0}', space=vmem, size = 0x1000, scoped, tag = 'input window, operand 4, single buffered']
    #allocation11 [shape = 'u8[393216]{0}', space=vmem, size = 0x60000, scoped, tag = 'input window, operand 5, single buffered']
    #allocation12 [shape = 's32[1]{0}', space=sflag, size = 0x4, scoped, tag = 'scoped memory for critic_forward.1']
    #allocation13 [shape = 'u8[1536]{0}', space=vmem, size = 0x800, scoped, tag = 'input window, operand 6, single buffered']
    #allocation14 [shape = 'u8[393216]{0}', space=vmem, size = 0x60000, scoped, tag = 'input window, operand 7, single buffered']
    #allocation15 [shape = 's32[1]{0}', space=sflag, size = 0x4, scoped, tag = 'scoped memory for critic_forward.1']
    #allocation16 [shape = 'u8[1536]{0}', space=vmem, size = 0x800, scoped, tag = 'input window, operand 8, single buffered']
    #allocation17 [shape = 'u8[196608]{0}', space=vmem, size = 0x30000, scoped, tag = 'input window, operand 9, single buffered']
    #allocation18 [shape = 's32[1]{0}', space=sflag, size = 0x4, scoped, tag = 'scoped memory for critic_forward.1']
    #allocation19 [shape = 'u8[512]{0}', space=vmem, size = 0x400, scoped, tag = 'input window, operand 10, single buffered']
    #allocation20 [shape = 'u8[8192]{0}', space=vmem, size = 0x2000, scoped, tag = 'output window, operand 0, single buffered']
    %16 = vsyncpa [#allocation3], 0
    %17 = vsyncpa [#allocation6], 0
    %18 = vsyncpa [#allocation9], 0
    %19 = vsyncpa [#allocation12], 0
    %20 = vsyncpa [#allocation15], 0
    %21 = vsyncpa [#allocation18], 0
    %22 = vsyncpa [#allocation4], 0
    // Predicated region
    $region2: #{critic_forward.1} parent=1 // pred_check
      _
    $region3: #{critic_forward.1} parent=1 // pred_check_branch
      %24 = sbr.rel (0) target = $region5
    $region4: #{critic_forward.1} parent=1 // pred_region
      %s26 = ssub.s32 256, 32
      %27 = vsyncadd [#allocation3], %s26
      %s28 = sshll.u32 [#allocation2], 4
      %s29 = int_to_ptr.vmem [resolvable:$true] %s28
      %34 = dma.hbm_to_vmem [thread:$0]  %s0, 32, %s29, [#allocation3], 32, 32, 2
    $region5: #{critic_forward.1} parent=1 // pred_fallthru
      _
    // Predicated region
    $region6: #{critic_forward.1} parent=1 // pred_check
      _
    $region7: #{critic_forward.1} parent=1 // pred_check_branch
      %36 = sbr.rel (0) target = $region9
    $region8: #{critic_forward.1} parent=1 // pred_region
      %s38 = ssub.s32 256, 32
      %39 = vsyncadd [#allocation6], %s38
      %s40 = sshll.u32 [#allocation5], 4
      %s41 = int_to_ptr.vmem [resolvable:$true] %s40
      %46 = dma.hbm_to_vmem [thread:$0]  %s1, 32, %s41, [#allocation6], 32, 32, 2
    $region9: #{critic_forward.1} parent=1 // pred_fallthru
      _
    // Predicated region
    $region10: #{critic_forward.1} parent=1 // pred_check
      _
    $region11: #{critic_forward.1} parent=1 // pred_check_branch
      %48 = sbr.rel (0) target = $region13
    $region12: #{critic_forward.1} parent=1 // pred_region
      %s50 = ssub.s32 512, 512
      %51 = vsyncadd [#allocation6], %s50
      %s53 = sshll.u32 [#allocation7], 4
      %s54 = int_to_ptr.vmem [resolvable:$true] %s53
      %56 = dma.hbm_to_vmem [thread:$0]  %s2, 512, %s54, [#allocation6]
    $region13: #{critic_forward.1} parent=1 // pred_fallthru
      _
    // Predicated region
    $region14: #{critic_forward.1} parent=1 // pred_check
      _
    $region15: #{critic_forward.1} parent=1 // pred_check_branch
      %58 = sbr.rel (0) target = $region17
    $region16: #{critic_forward.1} parent=1 // pred_region
      %s60 = ssub.s32 256, 256
      %61 = vsyncadd [#allocation9], %s60
      %s63 = sshll.u32 [#allocation8], 4
      %s64 = int_to_ptr.vmem [resolvable:$true] %s63
      %66 = dma.hbm_to_vmem [thread:$0]  %s3, 256, %s64, [#allocation9]
    $region17: #{critic_forward.1} parent=1 // pred_fallthru
      _
    // Predicated region
    $region18: #{critic_forward.1} parent=1 // pred_check
      _
    $region19: #{critic_forward.1} parent=1 // pred_check_branch
      %68 = sbr.rel (0) target = $region21
    $region20: #{critic_forward.1} parent=1 // pred_region
      %s70 = ssub.s32 128, 128
      %71 = vsyncadd [#allocation9], %s70
      %s73 = sshll.u32 [#allocation10], 4
      %s74 = int_to_ptr.vmem [resolvable:$true] %s73
      %76 = dma.hbm_to_vmem [thread:$0]  %s4, 128, %s74, [#allocation9]
    $region21: #{critic_forward.1} parent=1 // pred_fallthru
      _
    // Predicated region
    $region22: #{critic_forward.1} parent=1 // pred_check
      _
    $region23: #{critic_forward.1} parent=1 // pred_check_branch
      %78 = sbr.rel (0) target = $region25
    $region24: #{critic_forward.1} parent=1 // pred_region
      %s80 = ssub.s32 12288, 12288
      %81 = vsyncadd [#allocation12], %s80
      %s82 = sshll.u32 [#allocation11], 4
      %s83 = int_to_ptr.vmem [resolvable:$true] %s82
      %88 = dma.hbm_to_vmem [thread:$0]  %s5, 12288, %s83, [#allocation12], 192, 192, 12
    $region25: #{critic_forward.1} parent=1 // pred_fallthru
      _
    // Predicated region
    $region26: #{critic_forward.1} parent=1 // pred_check
      _
    $region27: #{critic_forward.1} parent=1 // pred_check_branch
      %90 = sbr.rel (0) target = $region29
    $region28: #{critic_forward.1} parent=1 // pred_region
      %s92 = ssub.s32 48, 48
      %93 = vsyncadd [#allocation12], %s92
      %s95 = sshll.u32 [#allocation13], 4
      %s96 = int_to_ptr.vmem [resolvable:$true] %s95
      %98 = dma.hbm_to_vmem [thread:$0]  %s6, 48, %s96, [#allocation12]
    $region29: #{critic_forward.1} parent=1 // pred_fallthru
      _
    // Predicated region
    $region30: #{critic_forward.1} parent=1 // pred_check
      _
    $region31: #{critic_forward.1} parent=1 // pred_check_branch
      %100 = sbr.rel (0) target = $region33
    $region32: #{critic_forward.1} parent=1 // pred_region
      %s102 = ssub.s32 12288, 12288
      %103 = vsyncadd [#allocation15], %s102
      %s104 = sshll.u32 [#allocation14], 4
      %s105 = int_to_ptr.vmem [resolvable:$true] %s104
      %110 = dma.hbm_to_vmem [thread:$0]  %s7, 12288, %s105, [#allocation15], 192, 192, 12
    $region33: #{critic_forward.1} parent=1 // pred_fallthru
      _
    // Predicated region
    $region34: #{critic_forward.1} parent=1 // pred_check
      _
    $region35: #{critic_forward.1} parent=1 // pred_check_branch
      %112 = sbr.rel (0) target = $region37
    $region36: #{critic_forward.1} parent=1 // pred_region
      %s114 = ssub.s32 48, 48
      %115 = vsyncadd [#allocation15], %s114
      %s117 = sshll.u32 [#allocation16], 4
      %s118 = int_to_ptr.vmem [resolvable:$true] %s117
      %120 = dma.hbm_to_vmem [thread:$0]  %s8, 48, %s118, [#allocation15]
    $region37: #{critic_forward.1} parent=1 // pred_fallthru
      _
    // Predicated region
    $region38: #{critic_forward.1} parent=1 // pred_check
      _
    $region39: #{critic_forward.1} parent=1 // pred_check_branch
      %122 = sbr.rel (0) target = $region41
    $region40: #{critic_forward.1} parent=1 // pred_region
      %s124 = ssub.s32 6144, 6144
      %125 = vsyncadd [#allocation18], %s124
      %s126 = sshll.u32 [#allocation17], 4
      %s127 = int_to_ptr.vmem [resolvable:$true] %s126
      %132 = dma.hbm_to_vmem [thread:$0]  %s9, 6144, %s127, [#allocation18], 64, 64, 4
    $region41: #{critic_forward.1} parent=1 // pred_fallthru
      _
    // Predicated region
    $region42: #{critic_forward.1} parent=1 // pred_check
      _
    $region43: #{critic_forward.1} parent=1 // pred_check_branch
      %134 = sbr.rel (0) target = $region45
    $region44: #{critic_forward.1} parent=1 // pred_region
      %s136 = ssub.s32 16, 16
      %137 = vsyncadd [#allocation18], %s136
      %s139 = sshll.u32 [#allocation19], 4
      %s140 = int_to_ptr.vmem [resolvable:$true] %s139
      %142 = dma.hbm_to_vmem [thread:$0]  %s10, 16, %s140, [#allocation18]
    $region45: #{critic_forward.1} parent=1 // pred_fallthru
      _
    // Predicated region
    $region46: #{critic_forward.1} parent=1 // pred_check
      _
    $region47: #{critic_forward.1} parent=1 // pred_check_branch
      %144 = sbr.rel (0) target = $region49
    $region48: #{critic_forward.1} parent=1 // pred_region
      %145 = dma.done [#allocation3], 256
    $region49: #{critic_forward.1} parent=1 // pred_fallthru
      _
    // Predicated region
    $region50: #{critic_forward.1} parent=1 // pred_check
      _
    $region51: #{critic_forward.1} parent=1 // pred_check_branch
      %147 = sbr.rel (0) target = $region53
    $region52: #{critic_forward.1} parent=1 // pred_region
      %148 = dma.done [#allocation6], 256
    $region53: #{critic_forward.1} parent=1 // pred_fallthru
      _
    // Predicated region
    $region54: #{critic_forward.1} parent=1 // pred_check
      _
    $region55: #{critic_forward.1} parent=1 // pred_check_branch
      %150 = sbr.rel (0) target = $region57
    $region56: #{critic_forward.1} parent=1 // pred_region
      %151 = dma.done [#allocation6], 512
    $region57: #{critic_forward.1} parent=1 // pred_fallthru
      _
    // Predicated region
    $region58: #{critic_forward.1} parent=1 // pred_check
      _
    $region59: #{critic_forward.1} parent=1 // pred_check_branch
      %153 = sbr.rel (0) target = $region61
    $region60: #{critic_forward.1} parent=1 // pred_region
      %154 = dma.done [#allocation9], 256
    $region61: #{critic_forward.1} parent=1 // pred_fallthru
      _
    // Predicated region
    $region62: #{critic_forward.1} parent=1 // pred_check
      _
    $region63: #{critic_forward.1} parent=1 // pred_check_branch
      %156 = sbr.rel (0) target = $region65
    $region64: #{critic_forward.1} parent=1 // pred_region
      %157 = dma.done [#allocation9], 128
    $region65: #{critic_forward.1} parent=1 // pred_fallthru
      _
    // Predicated region
    $region66: #{critic_forward.1} parent=1 // pred_check
      _
    $region67: #{critic_forward.1} parent=1 // pred_check_branch
      %159 = sbr.rel (0) target = $region69
    $region68: #{critic_forward.1} parent=1 // pred_region
      %160 = dma.done [#allocation12], 12288
    $region69: #{critic_forward.1} parent=1 // pred_fallthru
      _
    // Predicated region
    $region70: #{critic_forward.1} parent=1 // pred_check
      _
    $region71: #{critic_forward.1} parent=1 // pred_check_branch
      %162 = sbr.rel (0) target = $region73
    $region72: #{critic_forward.1} parent=1 // pred_region
      %163 = dma.done [#allocation12], 48
    $region73: #{critic_forward.1} parent=1 // pred_fallthru
      _
    // Predicated region
    $region74: #{critic_forward.1} parent=1 // pred_check
      _
    $region75: #{critic_forward.1} parent=1 // pred_check_branch
      %165 = sbr.rel (0) target = $region77
    $region76: #{critic_forward.1} parent=1 // pred_region
      %166 = dma.done [#allocation15], 12288
    $region77: #{critic_forward.1} parent=1 // pred_fallthru
      _
    // Predicated region
    $region78: #{critic_forward.1} parent=1 // pred_check
      _
    $region79: #{critic_forward.1} parent=1 // pred_check_branch
      %168 = sbr.rel (0) target = $region81
    $region80: #{critic_forward.1} parent=1 // pred_region
      %169 = dma.done [#allocation15], 48
    $region81: #{critic_forward.1} parent=1 // pred_fallthru
      _
    // Predicated region
    $region82: #{critic_forward.1} parent=1 // pred_check
      _
    $region83: #{critic_forward.1} parent=1 // pred_check_branch
      %171 = sbr.rel (0) target = $region85
    $region84: #{critic_forward.1} parent=1 // pred_region
      %172 = dma.done [#allocation18], 6144
    $region85: #{critic_forward.1} parent=1 // pred_fallthru
      _
    // Predicated region
    $region86: #{critic_forward.1} parent=1 // pred_check
      _
    $region87: #{critic_forward.1} parent=1 // pred_check_branch
      %174 = sbr.rel (0) target = $region89
    $region88: #{critic_forward.1} parent=1 // pred_region
      %175 = dma.done [#allocation18], 16
    $region89: #{critic_forward.1} parent=1 // pred_fallthru
      _
    %v177 = vld [vmem:[#allocation2] sm:$0xff]
    %v178 = vld [vmem:[#allocation2 + $0x8] sm:$0xff]
    %v179 = vpack.c.bf16 %v178, %v177
    %v180 = vld [vmem:[#allocation5] sm:$0xff]
    %v181 = vld [vmem:[#allocation5 + $0x8] sm:$0xff]
    %v182 = vpack.c.bf16 %v181, %v180
    %v183 = vld [vmem:[#allocation7] sm:$0xff]
    %v184 = vld [vmem:[#allocation7 + $0x8] sm:$0xff]
    %v185 = vld [vmem:[#allocation7 + $0x10] sm:$0xff]
    %v186 = vld [vmem:[#allocation7 + $0x18] sm:$0xff]
    %v187 = vld [vmem:[#allocation8] sm:$0xff]
    %v188 = vld [vmem:[#allocation8 + $0x8] sm:$0xff]
    %v191 = vcombine.high %v187, %v187
    %v193 = vunpack.c.l.s4 1983009808
    %v194 = vunpack.c.0.s8 %v193
    %v195 = vlaneseq
    %v196 = vshrl.u32 %v195, 7
    %v197 = vsub.s32 %v194, %v196
    %v198 = vrot.slane %v187, %v197
    %v200 = vunpack.c.l.s4 1983009808
    %v201 = vunpack.c.0.s8 %v200
    %v202 = vlaneseq
    %v203 = vshrl.u32 %v202, 7
    %v204 = vsub.s32 %v201, %v203
    %v205 = vrot.slane %v191, %v204
    %v206 = vcombine.high %v198, %v198
    %v207 = vcombine.high %v205, %v205
    %v208 = vcombine.high %v188, %v188
    %v210 = vunpack.c.l.s4 1983009808
    %v211 = vunpack.c.0.s8 %v210
    %v212 = vlaneseq
    %v213 = vshrl.u32 %v212, 7
    %v214 = vsub.s32 %v211, %v213
    %v215 = vrot.slane %v188, %v214
    %v217 = vunpack.c.l.s4 1983009808
    %v218 = vunpack.c.0.s8 %v217
    %v219 = vlaneseq
    %v220 = vshrl.u32 %v219, 7
    %v221 = vsub.s32 %v218, %v220
    %v222 = vrot.slane %v208, %v221
    %v223 = vcombine.high %v215, %v215
    %v224 = vcombine.high %v222, %v222
    %vm225 = vcmask 31744
    %v227 = vsel %vm225, %v182, 0
    %vm229 = vcmask 1041408
    %v231 = vsel %vm229, %v198, 0
    %v234 = vsel %vm229, %v206, 0
    %v237 = vsel %vm229, %v205, 0
    %v240 = vsel %vm229, %v207, 0
    %v243 = vsel %vm229, %v215, 0
    %v246 = vsel %vm229, %v223, 0
    %v249 = vsel %vm229, %v222, 0
    %v252 = vsel %vm229, %v224, 0
    %254 = vmatprep.subr.bf16.mxu0 %v234
    %255 = vmatpush1.bf16.msra.mxu0 %v231
    %256 = vmatprep.subr.bf16.mxu0 0
    %257 = vmatpush1.bf16.msra.mxu0 0
    %258 = vmatprep.subr.bf16.mxu0 0
    %259 = vmatpush1.bf16.msra.mxu0 0
    %260 = vmatprep.subr.bf16.mxu0 0
    %261 = vmatpush1.bf16.msra.mxu0 0
    %262 = vmatprep.subr.bf16.mxu0 0
    %263 = vmatpush1.bf16.msra.mxu0 0
    %264 = vmatprep.subr.bf16.mxu0 0
    %265 = vmatpush1.bf16.msra.mxu0 0
    %266 = vmatprep.subr.bf16.mxu0 0
    %267 = vmatpush1.bf16.msra.mxu0 0
    %268 = vmatprep.subr.bf16.mxu0 0
    %269 = vmatpush1.bf16.msra.mxu0 0
    %270 = vmatprep.subr.bf16.mxu0 0
    %271 = vmatpush1.bf16.msra.mxu0 0
    %272 = vmatprep.subr.bf16.mxu0 0
    %273 = vmatpush1.bf16.msra.mxu0 0
    %274 = vmatprep.subr.bf16.mxu0 0
    %275 = vmatpush1.bf16.msra.mxu0 0
    %276 = vmatprep.subr.bf16.mxu0 0
    %277 = vmatpush1.bf16.msra.mxu0 0
    %278 = vmatprep.subr.bf16.mxu0 0
    %279 = vmatpush1.bf16.msra.mxu0 0
    %280 = vmatprep.subr.bf16.mxu0 0
    %281 = vmatpush1.bf16.msra.mxu0 0
    %282 = vmatprep.subr.bf16.mxu0 0
    %283 = vmatpush1.bf16.msra.mxu0 0
    %284 = vmatprep.subr.bf16.mxu0 0
    %285 = vmatpush1.bf16.msra.mxu0 0
    %286 = vmatprep.mubr.bf16.mxu0 0
    %287 = vmatmul.mubr.bf16.gmra.mrb[0].mxu0 %v227
    %v288 = vpop.f32.mrb[0].mxu0
    %v289 = vadd.f32 0.0, %v288
    %v290 = vpop.f32.mrb[0].mxu0
    %v291 = vadd.f32 0.0, %v290
    %v292 = vpop.f32.mrb[0].mxu0
    %v293 = vadd.f32 0.0, %v292
    %v294 = vpop.f32.mrb[0].mxu0
    %v295 = vadd.f32 0.0, %v294
    %296 = vdwg.mxu0
    %297 = vmatprep.subr.bf16.mxu0 %v240
    %298 = vmatpush1.bf16.msra.mxu0 %v237
    %299 = vmatprep.subr.bf16.mxu0 0
    %300 = vmatpush1.bf16.msra.mxu0 0
    %301 = vmatprep.subr.bf16.mxu0 0
    %302 = vmatpush1.bf16.msra.mxu0 0
    %303 = vmatprep.subr.bf16.mxu0 0
    %304 = vmatpush1.bf16.msra.mxu0 0
    %305 = vmatprep.subr.bf16.mxu0 0
    %306 = vmatpush1.bf16.msra.mxu0 0
    %307 = vmatprep.subr.bf16.mxu0 0
    %308 = vmatpush1.bf16.msra.mxu0 0
    %309 = vmatprep.subr.bf16.mxu0 0
    %310 = vmatpush1.bf16.msra.mxu0 0
    %311 = vmatprep.subr.bf16.mxu0 0
    %312 = vmatpush1.bf16.msra.mxu0 0
    %313 = vmatprep.subr.bf16.mxu0 0
    %314 = vmatpush1.bf16.msra.mxu0 0
    %315 = vmatprep.subr.bf16.mxu0 0
    %316 = vmatpush1.bf16.msra.mxu0 0
    %317 = vmatprep.subr.bf16.mxu0 0
    %318 = vmatpush1.bf16.msra.mxu0 0
    %319 = vmatprep.subr.bf16.mxu0 0
    %320 = vmatpush1.bf16.msra.mxu0 0
    %321 = vmatprep.subr.bf16.mxu0 0
    %322 = vmatpush1.bf16.msra.mxu0 0
    %323 = vmatprep.subr.bf16.mxu0 0
    %324 = vmatpush1.bf16.msra.mxu0 0
    %325 = vmatprep.subr.bf16.mxu0 0
    %326 = vmatpush1.bf16.msra.mxu0 0
    %327 = vmatprep.subr.bf16.mxu0 0
    %328 = vmatpush1.bf16.msra.mxu0 0
    %329 = vmatprep.mubr.bf16.mxu0 0
    %330 = vmatmul.mubr.bf16.gmra.mrb[0].mxu0 %v227
    %v331 = vpop.f32.mrb[0].mxu0
    %v332 = vadd.f32 0.0, %v331
    %v333 = vpop.f32.mrb[0].mxu0
    %v334 = vadd.f32 0.0, %v333
    %v335 = vpop.f32.mrb[0].mxu0
    %v336 = vadd.f32 0.0, %v335
    %v337 = vpop.f32.mrb[0].mxu0
    %v338 = vadd.f32 0.0, %v337
    %339 = vdwg.mxu0
    %340 = vmatprep.subr.bf16.mxu0 %v246
    %341 = vmatpush1.bf16.msra.mxu0 %v243
    %342 = vmatprep.subr.bf16.mxu0 0
    %343 = vmatpush1.bf16.msra.mxu0 0
    %344 = vmatprep.subr.bf16.mxu0 0
    %345 = vmatpush1.bf16.msra.mxu0 0
    %346 = vmatprep.subr.bf16.mxu0 0
    %347 = vmatpush1.bf16.msra.mxu0 0
    %348 = vmatprep.subr.bf16.mxu0 0
    %349 = vmatpush1.bf16.msra.mxu0 0
    %350 = vmatprep.subr.bf16.mxu0 0
    %351 = vmatpush1.bf16.msra.mxu0 0
    %352 = vmatprep.subr.bf16.mxu0 0
    %353 = vmatpush1.bf16.msra.mxu0 0
    %354 = vmatprep.subr.bf16.mxu0 0
    %355 = vmatpush1.bf16.msra.mxu0 0
    %356 = vmatprep.subr.bf16.mxu0 0
    %357 = vmatpush1.bf16.msra.mxu0 0
    %358 = vmatprep.subr.bf16.mxu0 0
    %359 = vmatpush1.bf16.msra.mxu0 0
    %360 = vmatprep.subr.bf16.mxu0 0
    %361 = vmatpush1.bf16.msra.mxu0 0
    %362 = vmatprep.subr.bf16.mxu0 0
    %363 = vmatpush1.bf16.msra.mxu0 0
    %364 = vmatprep.subr.bf16.mxu0 0
    %365 = vmatpush1.bf16.msra.mxu0 0
    %366 = vmatprep.subr.bf16.mxu0 0
    %367 = vmatpush1.bf16.msra.mxu0 0
    %368 = vmatprep.subr.bf16.mxu0 0
    %369 = vmatpush1.bf16.msra.mxu0 0
    %370 = vmatprep.subr.bf16.mxu0 0
    %371 = vmatpush1.bf16.msra.mxu0 0
    %372 = vmatprep.mubr.bf16.mxu0 0
    %373 = vmatmul.mubr.bf16.gmra.mrb[0].mxu0 %v227
    %v374 = vpop.f32.mrb[0].mxu0
    %v375 = vadd.f32 0.0, %v374
    %v376 = vpop.f32.mrb[0].mxu0
    %v377 = vadd.f32 0.0, %v376
    %v378 = vpop.f32.mrb[0].mxu0
    %v379 = vadd.f32 0.0, %v378
    %v380 = vpop.f32.mrb[0].mxu0
    %v381 = vadd.f32 0.0, %v380
    %382 = vdwg.mxu0
    %383 = vmatprep.subr.bf16.mxu0 %v252
    %384 = vmatpush1.bf16.msra.mxu0 %v249
    %385 = vmatprep.subr.bf16.mxu0 0
    %386 = vmatpush1.bf16.msra.mxu0 0
    %387 = vmatprep.subr.bf16.mxu0 0
    %388 = vmatpush1.bf16.msra.mxu0 0
    %389 = vmatprep.subr.bf16.mxu0 0
    %390 = vmatpush1.bf16.msra.mxu0 0
    %391 = vmatprep.subr.bf16.mxu0 0
    %392 = vmatpush1.bf16.msra.mxu0 0
    %393 = vmatprep.subr.bf16.mxu0 0
    %394 = vmatpush1.bf16.msra.mxu0 0
    %395 = vmatprep.subr.bf16.mxu0 0
    %396 = vmatpush1.bf16.msra.mxu0 0
    %397 = vmatprep.subr.bf16.mxu0 0
    %398 = vmatpush1.bf16.msra.mxu0 0
    %399 = vmatprep.subr.bf16.mxu0 0
    %400 = vmatpush1.bf16.msra.mxu0 0
    %401 = vmatprep.subr.bf16.mxu0 0
    %402 = vmatpush1.bf16.msra.mxu0 0
    %403 = vmatprep.subr.bf16.mxu0 0
    %404 = vmatpush1.bf16.msra.mxu0 0
    %405 = vmatprep.subr.bf16.mxu0 0
    %406 = vmatpush1.bf16.msra.mxu0 0
    %407 = vmatprep.subr.bf16.mxu0 0
    %408 = vmatpush1.bf16.msra.mxu0 0
    %409 = vmatprep.subr.bf16.mxu0 0
    %410 = vmatpush1.bf16.msra.mxu0 0
    %411 = vmatprep.subr.bf16.mxu0 0
    %412 = vmatpush1.bf16.msra.mxu0 0
    %413 = vmatprep.subr.bf16.mxu0 0
    %414 = vmatpush1.bf16.msra.mxu0 0
    %415 = vmatprep.mubr.bf16.mxu0 0
    %416 = vmatmul.mubr.bf16.gmra.mrb[0].mxu0 %v227
    %v417 = vpop.f32.mrb[0].mxu0
    %v418 = vadd.f32 0.0, %v417
    %v419 = vpop.f32.mrb[0].mxu0
    %v420 = vadd.f32 0.0, %v419
    %v421 = vpop.f32.mrb[0].mxu0
    %v422 = vadd.f32 0.0, %v421
    %v423 = vpop.f32.mrb[0].mxu0
    %v424 = vadd.f32 0.0, %v423
    %425 = vdwg.mxu0
    %v430 = vunpack.c.l.b16 %v183
    %v431 = vunpack.c.h.b16 %v183
    %v432 = vunpack.c.l.b16 %v184
    %v433 = vunpack.c.h.b16 %v184
    %v434 = vunpack.c.l.b16 %v185
    %v435 = vunpack.c.h.b16 %v185
    %v436 = vunpack.c.l.b16 %v186
    %v437 = vunpack.c.h.b16 %v186
    %v438 = vpack.c.b16 %v430, %v430
    %v439 = vpack.c.b16 %v431, %v431
    %v440 = vpack.c.b16 %v432, %v432
    %v441 = vpack.c.b16 %v433, %v433
    %v442 = vpack.c.b16 %v434, %v434
    %v443 = vpack.c.b16 %v435, %v435
    %v444 = vpack.c.b16 %v436, %v436
    %v445 = vpack.c.b16 %v437, %v437
    %vm446 = vcmask 64512
    %v448 = vsel %vm446, %v179, 0
    %vm450 = vcmask 1043456
    %v452 = vsel %vm450, %v438, 0
    %v455 = vsel %vm450, %v439, 0
    %v458 = vsel %vm450, %v440, 0
    %v461 = vsel %vm450, %v441, 0
    %v464 = vsel %vm450, %v442, 0
    %v467 = vsel %vm450, %v443, 0
    %v470 = vsel %vm450, %v444, 0
    %v473 = vsel %vm450, %v445, 0
    %475 = vmatprep.subr.bf16.mxu0 %v455
    %476 = vmatpush1.bf16.msra.mxu0 %v452
    %477 = vmatprep.subr.bf16.mxu0 0
    %478 = vmatpush1.bf16.msra.mxu0 0
    %479 = vmatprep.subr.bf16.mxu0 0
    %480 = vmatpush1.bf16.msra.mxu0 0
    %481 = vmatprep.subr.bf16.mxu0 0
    %482 = vmatpush1.bf16.msra.mxu0 0
    %483 = vmatprep.subr.bf16.mxu0 0
    %484 = vmatpush1.bf16.msra.mxu0 0
    %485 = vmatprep.subr.bf16.mxu0 0
    %486 = vmatpush1.bf16.msra.mxu0 0
    %487 = vmatprep.subr.bf16.mxu0 0
    %488 = vmatpush1.bf16.msra.mxu0 0
    %489 = vmatprep.subr.bf16.mxu0 0
    %490 = vmatpush1.bf16.msra.mxu0 0
    %491 = vmatprep.subr.bf16.mxu0 0
    %492 = vmatpush1.bf16.msra.mxu0 0
    %493 = vmatprep.subr.bf16.mxu0 0
    %494 = vmatpush1.bf16.msra.mxu0 0
    %495 = vmatprep.subr.bf16.mxu0 0
    %496 = vmatpush1.bf16.msra.mxu0 0
    %497 = vmatprep.subr.bf16.mxu0 0
    %498 = vmatpush1.bf16.msra.mxu0 0
    %499 = vmatprep.subr.bf16.mxu0 0
    %500 = vmatpush1.bf16.msra.mxu0 0
    %501 = vmatprep.subr.bf16.mxu0 0
    %502 = vmatpush1.bf16.msra.mxu0 0
    %503 = vmatprep.subr.bf16.mxu0 0
    %504 = vmatpush1.bf16.msra.mxu0 0
    %505 = vmatprep.subr.bf16.mxu0 0
    %506 = vmatpush1.bf16.msra.mxu0 0
    %507 = vmatprep.mubr.bf16.mxu0 0
    %508 = vmatmul.mubr.bf16.gmra.mrb[0].mxu0 %v448
    %v509 = vpop.f32.mrb[0].mxu0
    %v510 = vadd.f32 %v289, %v509
    %v511 = vpop.f32.mrb[0].mxu0
    %v512 = vadd.f32 %v291, %v511
    %v513 = vpop.f32.mrb[0].mxu0
    %v514 = vadd.f32 %v293, %v513
    %v515 = vpop.f32.mrb[0].mxu0
    %v516 = vadd.f32 %v295, %v515
    %517 = vdwg.mxu0
    %518 = vmatprep.subr.bf16.mxu0 %v461
    %519 = vmatpush1.bf16.msra.mxu0 %v458
    %520 = vmatprep.subr.bf16.mxu0 0
    %521 = vmatpush1.bf16.msra.mxu0 0
    %522 = vmatprep.subr.bf16.mxu0 0
    %523 = vmatpush1.bf16.msra.mxu0 0
    %524 = vmatprep.subr.bf16.mxu0 0
    %525 = vmatpush1.bf16.msra.mxu0 0
    %526 = vmatprep.subr.bf16.mxu0 0
    %527 = vmatpush1.bf16.msra.mxu0 0
    %528 = vmatprep.subr.bf16.mxu0 0
    %529 = vmatpush1.bf16.msra.mxu0 0
    %530 = vmatprep.subr.bf16.mxu0 0
    %531 = vmatpush1.bf16.msra.mxu0 0
    %532 = vmatprep.subr.bf16.mxu0 0
    %533 = vmatpush1.bf16.msra.mxu0 0
    %534 = vmatprep.subr.bf16.mxu0 0
    %535 = vmatpush1.bf16.msra.mxu0 0
    %536 = vmatprep.subr.bf16.mxu0 0
    %537 = vmatpush1.bf16.msra.mxu0 0
    %538 = vmatprep.subr.bf16.mxu0 0
    %539 = vmatpush1.bf16.msra.mxu0 0
    %540 = vmatprep.subr.bf16.mxu0 0
    %541 = vmatpush1.bf16.msra.mxu0 0
    %542 = vmatprep.subr.bf16.mxu0 0
    %543 = vmatpush1.bf16.msra.mxu0 0
    %544 = vmatprep.subr.bf16.mxu0 0
    %545 = vmatpush1.bf16.msra.mxu0 0
    %546 = vmatprep.subr.bf16.mxu0 0
    %547 = vmatpush1.bf16.msra.mxu0 0
    %548 = vmatprep.subr.bf16.mxu0 0
    %549 = vmatpush1.bf16.msra.mxu0 0
    %550 = vmatprep.mubr.bf16.mxu0 0
    %551 = vmatmul.mubr.bf16.gmra.mrb[0].mxu0 %v448
    %v552 = vpop.f32.mrb[0].mxu0
    %v553 = vadd.f32 %v332, %v552
    %v554 = vpop.f32.mrb[0].mxu0
    %v555 = vadd.f32 %v334, %v554
    %v556 = vpop.f32.mrb[0].mxu0
    %v557 = vadd.f32 %v336, %v556
    %v558 = vpop.f32.mrb[0].mxu0
    %v559 = vadd.f32 %v338, %v558
    %560 = vdwg.mxu0
    %561 = vmatprep.subr.bf16.mxu0 %v467
    %562 = vmatpush1.bf16.msra.mxu0 %v464
    %563 = vmatprep.subr.bf16.mxu0 0
    %564 = vmatpush1.bf16.msra.mxu0 0
    %565 = vmatprep.subr.bf16.mxu0 0
    %566 = vmatpush1.bf16.msra.mxu0 0
    %567 = vmatprep.subr.bf16.mxu0 0
    %568 = vmatpush1.bf16.msra.mxu0 0
    %569 = vmatprep.subr.bf16.mxu0 0
    %570 = vmatpush1.bf16.msra.mxu0 0
    %571 = vmatprep.subr.bf16.mxu0 0
    %572 = vmatpush1.bf16.msra.mxu0 0
    %573 = vmatprep.subr.bf16.mxu0 0
    %574 = vmatpush1.bf16.msra.mxu0 0
    %575 = vmatprep.subr.bf16.mxu0 0
    %576 = vmatpush1.bf16.msra.mxu0 0
    %577 = vmatprep.subr.bf16.mxu0 0
    %578 = vmatpush1.bf16.msra.mxu0 0
    %579 = vmatprep.subr.bf16.mxu0 0
    %580 = vmatpush1.bf16.msra.mxu0 0
    %581 = vmatprep.subr.bf16.mxu0 0
    %582 = vmatpush1.bf16.msra.mxu0 0
    %583 = vmatprep.subr.bf16.mxu0 0
    %584 = vmatpush1.bf16.msra.mxu0 0
    %585 = vmatprep.subr.bf16.mxu0 0
    %586 = vmatpush1.bf16.msra.mxu0 0
    %587 = vmatprep.subr.bf16.mxu0 0
    %588 = vmatpush1.bf16.msra.mxu0 0
    %589 = vmatprep.subr.bf16.mxu0 0
    %590 = vmatpush1.bf16.msra.mxu0 0
    %591 = vmatprep.subr.bf16.mxu0 0
    %592 = vmatpush1.bf16.msra.mxu0 0
    %593 = vmatprep.mubr.bf16.mxu0 0
    %594 = vmatmul.mubr.bf16.gmra.mrb[0].mxu0 %v448
    %v595 = vpop.f32.mrb[0].mxu0
    %v596 = vadd.f32 %v375, %v595
    %v597 = vpop.f32.mrb[0].mxu0
    %v598 = vadd.f32 %v377, %v597
    %v599 = vpop.f32.mrb[0].mxu0
    %v600 = vadd.f32 %v379, %v599
    %v601 = vpop.f32.mrb[0].mxu0
    %v602 = vadd.f32 %v381, %v601
    %603 = vdwg.mxu0
    %604 = vmatprep.subr.bf16.mxu0 %v473
    %605 = vmatpush1.bf16.msra.mxu0 %v470
    %606 = vmatprep.subr.bf16.mxu0 0
    %607 = vmatpush1.bf16.msra.mxu0 0
    %608 = vmatprep.subr.bf16.mxu0 0
    %609 = vmatpush1.bf16.msra.mxu0 0
    %610 = vmatprep.subr.bf16.mxu0 0
    %611 = vmatpush1.bf16.msra.mxu0 0
    %612 = vmatprep.subr.bf16.mxu0 0
    %613 = vmatpush1.bf16.msra.mxu0 0
    %614 = vmatprep.subr.bf16.mxu0 0
    %615 = vmatpush1.bf16.msra.mxu0 0
    %616 = vmatprep.subr.bf16.mxu0 0
    %617 = vmatpush1.bf16.msra.mxu0 0
    %618 = vmatprep.subr.bf16.mxu0 0
    %619 = vmatpush1.bf16.msra.mxu0 0
    %620 = vmatprep.subr.bf16.mxu0 0
    %621 = vmatpush1.bf16.msra.mxu0 0
    %622 = vmatprep.subr.bf16.mxu0 0
    %623 = vmatpush1.bf16.msra.mxu0 0
    %624 = vmatprep.subr.bf16.mxu0 0
    %625 = vmatpush1.bf16.msra.mxu0 0
    %626 = vmatprep.subr.bf16.mxu0 0
    %627 = vmatpush1.bf16.msra.mxu0 0
    %628 = vmatprep.subr.bf16.mxu0 0
    %629 = vmatpush1.bf16.msra.mxu0 0
    %630 = vmatprep.subr.bf16.mxu0 0
    %631 = vmatpush1.bf16.msra.mxu0 0
    %632 = vmatprep.subr.bf16.mxu0 0
    %633 = vmatpush1.bf16.msra.mxu0 0
    %634 = vmatprep.subr.bf16.mxu0 0
    %635 = vmatpush1.bf16.msra.mxu0 0
    %636 = vmatprep.mubr.bf16.mxu0 0
    %637 = vmatmul.mubr.bf16.gmra.mrb[0].mxu0 %v448
    %v638 = vpop.f32.mrb[0].mxu0
    %v639 = vadd.f32 %v418, %v638
    %v640 = vpop.f32.mrb[0].mxu0
    %v641 = vadd.f32 %v420, %v640
    %v642 = vpop.f32.mrb[0].mxu0
    %v643 = vadd.f32 %v422, %v642
    %v644 = vpop.f32.mrb[0].mxu0
    %v645 = vadd.f32 %v424, %v644
    %646 = vdwg.mxu0
    %v647 = vld [vmem:[#allocation10] sm:$0xf]
    %v649 = vlaneseq
    %v650 = vshrl.u32 %v649, 7
    %v651 = vsub.s32 0, %v650
    %v652 = vrot.slane %v647, %v651
    %v653 = vlaneseq
    %v654 = vshrl.u32 %v653, 7
    %v655 = vsub.s32 1, %v654
    %v656 = vrot.slane %v647, %v655
    %v657 = vlaneseq
    %v658 = vshrl.u32 %v657, 7
    %v659 = vsub.s32 2, %v658
    %v660 = vrot.slane %v647, %v659
    %v661 = vlaneseq
    %v662 = vshrl.u32 %v661, 7
    %v663 = vsub.s32 3, %v662
    %v664 = vrot.slane %v647, %v663
    %v669 = vadd.f32 %v510, %v652
    %v670 = vadd.f32 %v512, %v656
    %v671 = vadd.f32 %v553, %v660
    %v672 = vadd.f32 %v555, %v664
    %v673 = vadd.f32 %v514, %v652
    %v674 = vadd.f32 %v516, %v656
    %v675 = vadd.f32 %v557, %v660
    %v676 = vadd.f32 %v559, %v664
    %v677 = vmax.f32 %v669, 0.0
    %v678 = vmax.f32 %v670, 0.0
    %v679 = vmax.f32 %v671, 0.0
    %v680 = vmax.f32 %v672, 0.0
    %v681 = vmax.f32 %v673, 0.0
    %v682 = vmax.f32 %v674, 0.0
    %v683 = vmax.f32 %v675, 0.0
    %v684 = vmax.f32 %v676, 0.0
    %v685 = vpack.c.bf16 %v681, %v677
    %v686 = vpack.c.bf16 %v682, %v678
    %v687 = vpack.c.bf16 %v683, %v679
    %v688 = vpack.c.bf16 %v684, %v680
    %v689 = vld [vmem:[#allocation10 + $0x4] sm:$0xf]
    %v691 = vlaneseq
    %v692 = vshrl.u32 %v691, 7
    %v693 = vsub.s32 0, %v692
    %v694 = vrot.slane %v689, %v693
    %v695 = vlaneseq
    %v696 = vshrl.u32 %v695, 7
    %v697 = vsub.s32 1, %v696
    %v698 = vrot.slane %v689, %v697
    %v699 = vlaneseq
    %v700 = vshrl.u32 %v699, 7
    %v701 = vsub.s32 2, %v700
    %v702 = vrot.slane %v689, %v701
    %v703 = vlaneseq
    %v704 = vshrl.u32 %v703, 7
    %v705 = vsub.s32 3, %v704
    %v706 = vrot.slane %v689, %v705
    %v711 = vadd.f32 %v596, %v694
    %v712 = vadd.f32 %v598, %v698
    %v713 = vadd.f32 %v639, %v702
    %v714 = vadd.f32 %v641, %v706
    %v715 = vadd.f32 %v600, %v694
    %v716 = vadd.f32 %v602, %v698
    %v717 = vadd.f32 %v643, %v702
    %v718 = vadd.f32 %v645, %v706
    %v719 = vmax.f32 %v711, 0.0
    %v720 = vmax.f32 %v712, 0.0
    %v721 = vmax.f32 %v713, 0.0
    %v722 = vmax.f32 %v714, 0.0
    %v723 = vmax.f32 %v715, 0.0
    %v724 = vmax.f32 %v716, 0.0
    %v725 = vmax.f32 %v717, 0.0
    %v726 = vmax.f32 %v718, 0.0
    %v727 = vpack.c.bf16 %v723, %v719
    %v728 = vpack.c.bf16 %v724, %v720
    %v729 = vpack.c.bf16 %v725, %v721
    %v730 = vpack.c.bf16 %v726, %v722
    %v731 = vld [vmem:[#allocation11] sm:$0xff]
    %v732 = vld [vmem:[#allocation11 + $0x8] sm:$0xf]
    %v733 = vld [vmem:[#allocation11 + $0xc] sm:$0xff]
    %v734 = vld [vmem:[#allocation11 + $0x14] sm:$0xf]
    %v735 = vld [vmem:[#allocation11 + $0x18] sm:$0xff]
    %v736 = vld [vmem:[#allocation11 + $0x20] sm:$0xf]
    %v737 = vld [vmem:[#allocation11 + $0x24] sm:$0xff]
    %v738 = vld [vmem:[#allocation11 + $0x2c] sm:$0xf]
    %v739 = vld [vmem:[#allocation11 + $0x30] sm:$0xff]
    %v740 = vld [vmem:[#allocation11 + $0x38] sm:$0xf]
    %v741 = vld [vmem:[#allocation11 + $0x3c] sm:$0xff]
    %v742 = vld [vmem:[#allocation11 + $0x44] sm:$0xf]
    %v743 = vld [vmem:[#allocation11 + $0x48] sm:$0xff]
    %v744 = vld [vmem:[#allocation11 + $0x50] sm:$0xf]
    %v745 = vld [vmem:[#allocation11 + $0x54] sm:$0xff]
    %v746 = vld [vmem:[#allocation11 + $0x5c] sm:$0xf]
    %v747 = vld [vmem:[#allocation11 + $0x60] sm:$0xff]
    %v748 = vld [vmem:[#allocation11 + $0x68] sm:$0xf]
    %v749 = vld [vmem:[#allocation11 + $0x6c] sm:$0xff]
    %v750 = vld [vmem:[#allocation11 + $0x74] sm:$0xf]
    %v751 = vld [vmem:[#allocation11 + $0x78] sm:$0xff]
    %v752 = vld [vmem:[#allocation11 + $0x80] sm:$0xf]
    %v753 = vld [vmem:[#allocation11 + $0x84] sm:$0xff]
    %v754 = vld [vmem:[#allocation11 + $0x8c] sm:$0xf]
    %v755 = vld [vmem:[#allocation11 + $0x90] sm:$0xff]
    %v756 = vld [vmem:[#allocation11 + $0x98] sm:$0xf]
    %v757 = vld [vmem:[#allocation11 + $0x9c] sm:$0xff]
    %v758 = vld [vmem:[#allocation11 + $0xa4] sm:$0xf]
    %v759 = vld [vmem:[#allocation11 + $0xa8] sm:$0xff]
    %v760 = vld [vmem:[#allocation11 + $0xb0] sm:$0xf]
    %v761 = vld [vmem:[#allocation11 + $0xb4] sm:$0xff]
    %v762 = vld [vmem:[#allocation11 + $0xbc] sm:$0xf]
    %v763 = vld [vmem:[#allocation11 + $0xc0] sm:$0xff]
    %v764 = vld [vmem:[#allocation11 + $0xc8] sm:$0xf]
    %v765 = vld [vmem:[#allocation11 + $0xcc] sm:$0xff]
    %v766 = vld [vmem:[#allocation11 + $0xd4] sm:$0xf]
    %v767 = vld [vmem:[#allocation11 + $0xd8] sm:$0xff]
    %v768 = vld [vmem:[#allocation11 + $0xe0] sm:$0xf]
    %v769 = vld [vmem:[#allocation11 + $0xe4] sm:$0xff]
    %v770 = vld [vmem:[#allocation11 + $0xec] sm:$0xf]
    %v771 = vld [vmem:[#allocation11 + $0xf0] sm:$0xff]
    %v772 = vld [vmem:[#allocation11 + $0xf8] sm:$0xf]
    %v773 = vld [vmem:[#allocation11 + $0xfc] sm:$0xff]
    %v774 = vld [vmem:[#allocation11 + $0x104] sm:$0xf]
    %v775 = vld [vmem:[#allocation11 + $0x108] sm:$0xff]
    %v776 = vld [vmem:[#allocation11 + $0x110] sm:$0xf]
    %v777 = vld [vmem:[#allocation11 + $0x114] sm:$0xff]
    %v778 = vld [vmem:[#allocation11 + $0x11c] sm:$0xf]
    %v779 = vld [vmem:[#allocation11 + $0x120] sm:$0xff]
    %v780 = vld [vmem:[#allocation11 + $0x128] sm:$0xf]
    %v781 = vld [vmem:[#allocation11 + $0x12c] sm:$0xff]
    %v782 = vld [vmem:[#allocation11 + $0x134] sm:$0xf]
    %v783 = vld [vmem:[#allocation11 + $0x138] sm:$0xff]
    %v784 = vld [vmem:[#allocation11 + $0x140] sm:$0xf]
    %v785 = vld [vmem:[#allocation11 + $0x144] sm:$0xff]
    %v786 = vld [vmem:[#allocation11 + $0x14c] sm:$0xf]
    %v787 = vld [vmem:[#allocation11 + $0x150] sm:$0xff]
    %v788 = vld [vmem:[#allocation11 + $0x158] sm:$0xf]
    %v789 = vld [vmem:[#allocation11 + $0x15c] sm:$0xff]
    %v790 = vld [vmem:[#allocation11 + $0x164] sm:$0xf]
    %v791 = vld [vmem:[#allocation11 + $0x168] sm:$0xff]
    %v792 = vld [vmem:[#allocation11 + $0x170] sm:$0xf]
    %v793 = vld [vmem:[#allocation11 + $0x174] sm:$0xff]
    %v794 = vld [vmem:[#allocation11 + $0x17c] sm:$0xf]
    %v795 = vld [vmem:[#allocation11 + $0x180] sm:$0xff]
    %v796 = vld [vmem:[#allocation11 + $0x188] sm:$0xf]
    %v797 = vld [vmem:[#allocation11 + $0x18c] sm:$0xff]
    %v798 = vld [vmem:[#allocation11 + $0x194] sm:$0xf]
    %v799 = vld [vmem:[#allocation11 + $0x198] sm:$0xff]
    %v800 = vld [vmem:[#allocation11 + $0x1a0] sm:$0xf]
    %v801 = vld [vmem:[#allocation11 + $0x1a4] sm:$0xff]
    %v802 = vld [vmem:[#allocation11 + $0x1ac] sm:$0xf]
    %v803 = vld [vmem:[#allocation11 + $0x1b0] sm:$0xff]
    %v804 = vld [vmem:[#allocation11 + $0x1b8] sm:$0xf]
    %v805 = vld [vmem:[#allocation11 + $0x1bc] sm:$0xff]
    %v806 = vld [vmem:[#allocation11 + $0x1c4] sm:$0xf]
    %v807 = vld [vmem:[#allocation11 + $0x1c8] sm:$0xff]
    %v808 = vld [vmem:[#allocation11 + $0x1d0] sm:$0xf]
    %v809 = vld [vmem:[#allocation11 + $0x1d4] sm:$0xff]
    %v810 = vld [vmem:[#allocation11 + $0x1dc] sm:$0xf]
    %v811 = vld [vmem:[#allocation11 + $0x1e0] sm:$0xff]
    %v812 = vld [vmem:[#allocation11 + $0x1e8] sm:$0xf]
    %v813 = vld [vmem:[#allocation11 + $0x1ec] sm:$0xff]
    %v814 = vld [vmem:[#allocation11 + $0x1f4] sm:$0xf]
    %v815 = vld [vmem:[#allocation11 + $0x1f8] sm:$0xff]
    %v816 = vld [vmem:[#allocation11 + $0x200] sm:$0xf]
    %v817 = vld [vmem:[#allocation11 + $0x204] sm:$0xff]
    %v818 = vld [vmem:[#allocation11 + $0x20c] sm:$0xf]
    %v819 = vld [vmem:[#allocation11 + $0x210] sm:$0xff]
    %v820 = vld [vmem:[#allocation11 + $0x218] sm:$0xf]
    %v821 = vld [vmem:[#allocation11 + $0x21c] sm:$0xff]
    %v822 = vld [vmem:[#allocation11 + $0x224] sm:$0xf]
    %v823 = vld [vmem:[#allocation11 + $0x228] sm:$0xff]
    %v824 = vld [vmem:[#allocation11 + $0x230] sm:$0xf]
    %v825 = vld [vmem:[#allocation11 + $0x234] sm:$0xff]
    %v826 = vld [vmem:[#allocation11 + $0x23c] sm:$0xf]
    %v827 = vld [vmem:[#allocation11 + $0x240] sm:$0xff]
    %v828 = vld [vmem:[#allocation11 + $0x248] sm:$0xf]
    %v829 = vld [vmem:[#allocation11 + $0x24c] sm:$0xff]
    %v830 = vld [vmem:[#allocation11 + $0x254] sm:$0xf]
    %v831 = vld [vmem:[#allocation11 + $0x258] sm:$0xff]
    %v832 = vld [vmem:[#allocation11 + $0x260] sm:$0xf]
    %v833 = vld [vmem:[#allocation11 + $0x264] sm:$0xff]
    %v834 = vld [vmem:[#allocation11 + $0x26c] sm:$0xf]
    %v835 = vld [vmem:[#allocation11 + $0x270] sm:$0xff]
    %v836 = vld [vmem:[#allocation11 + $0x278] sm:$0xf]
    %v837 = vld [vmem:[#allocation11 + $0x27c] sm:$0xff]
    %v838 = vld [vmem:[#allocation11 + $0x284] sm:$0xf]
    %v839 = vld [vmem:[#allocation11 + $0x288] sm:$0xff]
    %v840 = vld [vmem:[#allocation11 + $0x290] sm:$0xf]
    %v841 = vld [vmem:[#allocation11 + $0x294] sm:$0xff]
    %v842 = vld [vmem:[#allocation11 + $0x29c] sm:$0xf]
    %v843 = vld [vmem:[#allocation11 + $0x2a0] sm:$0xff]
    %v844 = vld [vmem:[#allocation11 + $0x2a8] sm:$0xf]
    %v845 = vld [vmem:[#allocation11 + $0x2ac] sm:$0xff]
    %v846 = vld [vmem:[#allocation11 + $0x2b4] sm:$0xf]
    %v847 = vld [vmem:[#allocation11 + $0x2b8] sm:$0xff]
    %v848 = vld [vmem:[#allocation11 + $0x2c0] sm:$0xf]
    %v849 = vld [vmem:[#allocation11 + $0x2c4] sm:$0xff]
    %v850 = vld [vmem:[#allocation11 + $0x2cc] sm:$0xf]
    %v851 = vld [vmem:[#allocation11 + $0x2d0] sm:$0xff]
    %v852 = vld [vmem:[#allocation11 + $0x2d8] sm:$0xf]
    %v853 = vld [vmem:[#allocation11 + $0x2dc] sm:$0xff]
    %v854 = vld [vmem:[#allocation11 + $0x2e4] sm:$0xf]
    %v855 = vld [vmem:[#allocation11 + $0x2e8] sm:$0xff]
    %v856 = vld [vmem:[#allocation11 + $0x2f0] sm:$0xf]
    %v857 = vld [vmem:[#allocation11 + $0x2f4] sm:$0xff]
    %v858 = vld [vmem:[#allocation11 + $0x2fc] sm:$0xf]
    %v859 = vld [vmem:[#allocation13] sm:$0x7]
    %v861 = vlaneseq
    %v862 = vshrl.u32 %v861, 7
    %v863 = vsub.s32 0, %v862
    %v864 = vrot.slane %v859, %v863
    %v865 = vlaneseq
    %v866 = vshrl.u32 %v865, 7
    %v867 = vsub.s32 1, %v866
    %v868 = vrot.slane %v859, %v867
    %v869 = vlaneseq
    %v870 = vshrl.u32 %v869, 7
    %v871 = vsub.s32 2, %v870
    %v872 = vrot.slane %v859, %v871
    %v1004 = vunpack.c.l.b16 %v731
    %v1005 = vunpack.c.h.b16 %v731
    %v1006 = vunpack.c.l.b16 %v732
    %v1007 = vunpack.c.l.b16 %v733
    %v1008 = vunpack.c.h.b16 %v733
    %v1009 = vunpack.c.l.b16 %v734
    %v1010 = vunpack.c.l.b16 %v735
    %v1011 = vunpack.c.h.b16 %v735
    %v1012 = vunpack.c.l.b16 %v736
    %v1013 = vunpack.c.l.b16 %v737
    %v1014 = vunpack.c.h.b16 %v737
    %v1015 = vunpack.c.l.b16 %v738
    %v1016 = vunpack.c.l.b16 %v739
    %v1017 = vunpack.c.h.b16 %v739
    %v1018 = vunpack.c.l.b16 %v740
    %v1019 = vunpack.c.l.b16 %v741
    %v1020 = vunpack.c.h.b16 %v741
    %v1021 = vunpack.c.l.b16 %v742
    %v1022 = vunpack.c.l.b16 %v743
    %v1023 = vunpack.c.h.b16 %v743
    %v1024 = vunpack.c.l.b16 %v744
    %v1025 = vunpack.c.l.b16 %v745
    %v1026 = vunpack.c.h.b16 %v745
    %v1027 = vunpack.c.l.b16 %v746
    %v1028 = vunpack.c.l.b16 %v747
    %v1029 = vunpack.c.h.b16 %v747
    %v1030 = vunpack.c.l.b16 %v748
    %v1031 = vunpack.c.l.b16 %v749
    %v1032 = vunpack.c.h.b16 %v749
    %v1033 = vunpack.c.l.b16 %v750
    %v1034 = vunpack.c.l.b16 %v751
    %v1035 = vunpack.c.h.b16 %v751
    %v1036 = vunpack.c.l.b16 %v752
    %v1037 = vunpack.c.l.b16 %v753
    %v1038 = vunpack.c.h.b16 %v753
    %v1039 = vunpack.c.l.b16 %v754
    %v1040 = vunpack.c.l.b16 %v755
    %v1041 = vunpack.c.h.b16 %v755
    %v1042 = vunpack.c.l.b16 %v756
    %v1043 = vunpack.c.l.b16 %v757
    %v1044 = vunpack.c.h.b16 %v757
    %v1045 = vunpack.c.l.b16 %v758
    %v1046 = vunpack.c.l.b16 %v759
    %v1047 = vunpack.c.h.b16 %v759
    %v1048 = vunpack.c.l.b16 %v760
    %v1049 = vunpack.c.l.b16 %v761
    %v1050 = vunpack.c.h.b16 %v761
    %v1051 = vunpack.c.l.b16 %v762
    %v1052 = vunpack.c.l.b16 %v763
    %v1053 = vunpack.c.h.b16 %v763
    %v1054 = vunpack.c.l.b16 %v764
    %v1055 = vunpack.c.l.b16 %v765
    %v1056 = vunpack.c.h.b16 %v765
    %v1057 = vunpack.c.l.b16 %v766
    %v1058 = vunpack.c.l.b16 %v767
    %v1059 = vunpack.c.h.b16 %v767
    %v1060 = vunpack.c.l.b16 %v768
    %v1061 = vunpack.c.l.b16 %v769
    %v1062 = vunpack.c.h.b16 %v769
    %v1063 = vunpack.c.l.b16 %v770
    %v1064 = vunpack.c.l.b16 %v771
    %v1065 = vunpack.c.h.b16 %v771
    %v1066 = vunpack.c.l.b16 %v772
    %v1067 = vunpack.c.l.b16 %v773
    %v1068 = vunpack.c.h.b16 %v773
    %v1069 = vunpack.c.l.b16 %v774
    %v1070 = vunpack.c.l.b16 %v775
    %v1071 = vunpack.c.h.b16 %v775
    %v1072 = vunpack.c.l.b16 %v776
    %v1073 = vunpack.c.l.b16 %v777
    %v1074 = vunpack.c.h.b16 %v777
    %v1075 = vunpack.c.l.b16 %v778
    %v1076 = vunpack.c.l.b16 %v779
    %v1077 = vunpack.c.h.b16 %v779
    %v1078 = vunpack.c.l.b16 %v780
    %v1079 = vunpack.c.l.b16 %v781
    %v1080 = vunpack.c.h.b16 %v781
    %v1081 = vunpack.c.l.b16 %v782
    %v1082 = vunpack.c.l.b16 %v783
    %v1083 = vunpack.c.h.b16 %v783
    %v1084 = vunpack.c.l.b16 %v784
    %v1085 = vunpack.c.l.b16 %v785
    %v1086 = vunpack.c.h.b16 %v785
    %v1087 = vunpack.c.l.b16 %v786
    %v1088 = vunpack.c.l.b16 %v787
    %v1089 = vunpack.c.h.b16 %v787
    %v1090 = vunpack.c.l.b16 %v788
    %v1091 = vunpack.c.l.b16 %v789
    %v1092 = vunpack.c.h.b16 %v789
    %v1093 = vunpack.c.l.b16 %v790
    %v1094 = vunpack.c.l.b16 %v791
    %v1095 = vunpack.c.h.b16 %v791
    %v1096 = vunpack.c.l.b16 %v792
    %v1097 = vunpack.c.l.b16 %v793
    %v1098 = vunpack.c.h.b16 %v793
    %v1099 = vunpack.c.l.b16 %v794
    %v1100 = vunpack.c.l.b16 %v795
    %v1101 = vunpack.c.h.b16 %v795
    %v1102 = vunpack.c.l.b16 %v796
    %v1103 = vunpack.c.l.b16 %v797
    %v1104 = vunpack.c.h.b16 %v797
    %v1105 = vunpack.c.l.b16 %v798
    %v1106 = vunpack.c.l.b16 %v799
    %v1107 = vunpack.c.h.b16 %v799
    %v1108 = vunpack.c.l.b16 %v800
    %v1109 = vunpack.c.l.b16 %v801
    %v1110 = vunpack.c.h.b16 %v801
    %v1111 = vunpack.c.l.b16 %v802
    %v1112 = vunpack.c.l.b16 %v803
    %v1113 = vunpack.c.h.b16 %v803
    %v1114 = vunpack.c.l.b16 %v804
    %v1115 = vunpack.c.l.b16 %v805
    %v1116 = vunpack.c.h.b16 %v805
    %v1117 = vunpack.c.l.b16 %v806
    %v1118 = vunpack.c.l.b16 %v807
    %v1119 = vunpack.c.h.b16 %v807
    %v1120 = vunpack.c.l.b16 %v808
    %v1121 = vunpack.c.l.b16 %v809
    %v1122 = vunpack.c.h.b16 %v809
    %v1123 = vunpack.c.l.b16 %v810
    %v1124 = vunpack.c.l.b16 %v811
    %v1125 = vunpack.c.h.b16 %v811
    %v1126 = vunpack.c.l.b16 %v812
    %v1127 = vunpack.c.l.b16 %v813
    %v1128 = vunpack.c.h.b16 %v813
    %v1129 = vunpack.c.l.b16 %v814
    %v1130 = vunpack.c.l.b16 %v815
    %v1131 = vunpack.c.h.b16 %v815
    %v1132 = vunpack.c.l.b16 %v816
    %v1133 = vunpack.c.l.b16 %v817
    %v1134 = vunpack.c.h.b16 %v817
    %v1135 = vunpack.c.l.b16 %v818
    %v1136 = vunpack.c.l.b16 %v819
    %v1137 = vunpack.c.h.b16 %v819
    %v1138 = vunpack.c.l.b16 %v820
    %v1139 = vunpack.c.l.b16 %v821
    %v1140 = vunpack.c.h.b16 %v821
    %v1141 = vunpack.c.l.b16 %v822
    %v1142 = vunpack.c.l.b16 %v823
    %v1143 = vunpack.c.h.b16 %v823
    %v1144 = vunpack.c.l.b16 %v824
    %v1145 = vunpack.c.l.b16 %v825
    %v1146 = vunpack.c.h.b16 %v825
    %v1147 = vunpack.c.l.b16 %v826
    %v1148 = vunpack.c.l.b16 %v827
    %v1149 = vunpack.c.h.b16 %v827
    %v1150 = vunpack.c.l.b16 %v828
    %v1151 = vunpack.c.l.b16 %v829
    %v1152 = vunpack.c.h.b16 %v829
    %v1153 = vunpack.c.l.b16 %v830
    %v1154 = vunpack.c.l.b16 %v831
    %v1155 = vunpack.c.h.b16 %v831
    %v1156 = vunpack.c.l.b16 %v832
    %v1157 = vunpack.c.l.b16 %v833
    %v1158 = vunpack.c.h.b16 %v833
    %v1159 = vunpack.c.l.b16 %v834
    %v1160 = vunpack.c.l.b16 %v835
    %v1161 = vunpack.c.h.b16 %v835
    %v1162 = vunpack.c.l.b16 %v836
    %v1163 = vunpack.c.l.b16 %v837
    %v1164 = vunpack.c.h.b16 %v837
    %v1165 = vunpack.c.l.b16 %v838
    %v1166 = vunpack.c.l.b16 %v839
    %v1167 = vunpack.c.h.b16 %v839
    %v1168 = vunpack.c.l.b16 %v840
    %v1169 = vunpack.c.l.b16 %v841
    %v1170 = vunpack.c.h.b16 %v841
    %v1171 = vunpack.c.l.b16 %v842
    %v1172 = vunpack.c.l.b16 %v843
    %v1173 = vunpack.c.h.b16 %v843
    %v1174 = vunpack.c.l.b16 %v844
    %v1175 = vunpack.c.l.b16 %v845
    %v1176 = vunpack.c.h.b16 %v845
    %v1177 = vunpack.c.l.b16 %v846
    %v1178 = vunpack.c.l.b16 %v847
    %v1179 = vunpack.c.h.b16 %v847
    %v1180 = vunpack.c.l.b16 %v848
    %v1181 = vunpack.c.l.b16 %v849
    %v1182 = vunpack.c.h.b16 %v849
    %v1183 = vunpack.c.l.b16 %v850
    %v1184 = vunpack.c.l.b16 %v851
    %v1185 = vunpack.c.h.b16 %v851
    %v1186 = vunpack.c.l.b16 %v852
    %v1187 = vunpack.c.l.b16 %v853
    %v1188 = vunpack.c.h.b16 %v853
    %v1189 = vunpack.c.l.b16 %v854
    %v1190 = vunpack.c.l.b16 %v855
    %v1191 = vunpack.c.h.b16 %v855
    %v1192 = vunpack.c.l.b16 %v856
    %v1193 = vunpack.c.l.b16 %v857
    %v1194 = vunpack.c.h.b16 %v857
    %v1195 = vunpack.c.l.b16 %v858
    %v1196 = vpack.c.b16 %v1007, %v1004
    %v1197 = vpack.c.b16 %v1008, %v1005
    %v1198 = vpack.c.b16 %v1009, %v1006
    %v1199 = vpack.c.b16 %v1013, %v1010
    %v1200 = vpack.c.b16 %v1014, %v1011
    %v1201 = vpack.c.b16 %v1015, %v1012
    %v1202 = vpack.c.b16 %v1019, %v1016
    %v1203 = vpack.c.b16 %v1020, %v1017
    %v1204 = vpack.c.b16 %v1021, %v1018
    %v1205 = vpack.c.b16 %v1025, %v1022
    %v1206 = vpack.c.b16 %v1026, %v1023
    %v1207 = vpack.c.b16 %v1027, %v1024
    %v1208 = vpack.c.b16 %v1031, %v1028
    %v1209 = vpack.c.b16 %v1032, %v1029
    %v1210 = vpack.c.b16 %v1033, %v1030
    %v1211 = vpack.c.b16 %v1037, %v1034
    %v1212 = vpack.c.b16 %v1038, %v1035
    %v1213 = vpack.c.b16 %v1039, %v1036
    %v1214 = vpack.c.b16 %v1043, %v1040
    %v1215 = vpack.c.b16 %v1044, %v1041
    %v1216 = vpack.c.b16 %v1045, %v1042
    %v1217 = vpack.c.b16 %v1049, %v1046
    %v1218 = vpack.c.b16 %v1050, %v1047
    %v1219 = vpack.c.b16 %v1051, %v1048
    %v1220 = vpack.c.b16 %v1055, %v1052
    %v1221 = vpack.c.b16 %v1056, %v1053
    %v1222 = vpack.c.b16 %v1057, %v1054
    %v1223 = vpack.c.b16 %v1061, %v1058
    %v1224 = vpack.c.b16 %v1062, %v1059
    %v1225 = vpack.c.b16 %v1063, %v1060
    %v1226 = vpack.c.b16 %v1067, %v1064
    %v1227 = vpack.c.b16 %v1068, %v1065
    %v1228 = vpack.c.b16 %v1069, %v1066
    %v1229 = vpack.c.b16 %v1073, %v1070
    %v1230 = vpack.c.b16 %v1074, %v1071
    %v1231 = vpack.c.b16 %v1075, %v1072
    %v1232 = vpack.c.b16 %v1079, %v1076
    %v1233 = vpack.c.b16 %v1080, %v1077
    %v1234 = vpack.c.b16 %v1081, %v1078
    %v1235 = vpack.c.b16 %v1085, %v1082
    %v1236 = vpack.c.b16 %v1086, %v1083
    %v1237 = vpack.c.b16 %v1087, %v1084
    %v1238 = vpack.c.b16 %v1091, %v1088
    %v1239 = vpack.c.b16 %v1092, %v1089
    %v1240 = vpack.c.b16 %v1093, %v1090
    %v1241 = vpack.c.b16 %v1097, %v1094
    %v1242 = vpack.c.b16 %v1098, %v1095
    %v1243 = vpack.c.b16 %v1099, %v1096
    %v1244 = vpack.c.b16 %v1103, %v1100
    %v1245 = vpack.c.b16 %v1104, %v1101
    %v1246 = vpack.c.b16 %v1105, %v1102
    %v1247 = vpack.c.b16 %v1109, %v1106
    %v1248 = vpack.c.b16 %v1110, %v1107
    %v1249 = vpack.c.b16 %v1111, %v1108
    %v1250 = vpack.c.b16 %v1115, %v1112
    %v1251 = vpack.c.b16 %v1116, %v1113
    %v1252 = vpack.c.b16 %v1117, %v1114
    %v1253 = vpack.c.b16 %v1121, %v1118
    %v1254 = vpack.c.b16 %v1122, %v1119
    %v1255 = vpack.c.b16 %v1123, %v1120
    %v1256 = vpack.c.b16 %v1127, %v1124
    %v1257 = vpack.c.b16 %v1128, %v1125
    %v1258 = vpack.c.b16 %v1129, %v1126
    %v1259 = vpack.c.b16 %v1133, %v1130
    %v1260 = vpack.c.b16 %v1134, %v1131
    %v1261 = vpack.c.b16 %v1135, %v1132
    %v1262 = vpack.c.b16 %v1139, %v1136
    %v1263 = vpack.c.b16 %v1140, %v1137
    %v1264 = vpack.c.b16 %v1141, %v1138
    %v1265 = vpack.c.b16 %v1145, %v1142
    %v1266 = vpack.c.b16 %v1146, %v1143
    %v1267 = vpack.c.b16 %v1147, %v1144
    %v1268 = vpack.c.b16 %v1151, %v1148
    %v1269 = vpack.c.b16 %v1152, %v1149
    %v1270 = vpack.c.b16 %v1153, %v1150
    %v1271 = vpack.c.b16 %v1157, %v1154
    %v1272 = vpack.c.b16 %v1158, %v1155
    %v1273 = vpack.c.b16 %v1159, %v1156
    %v1274 = vpack.c.b16 %v1163, %v1160
    %v1275 = vpack.c.b16 %v1164, %v1161
    %v1276 = vpack.c.b16 %v1165, %v1162
    %v1277 = vpack.c.b16 %v1169, %v1166
    %v1278 = vpack.c.b16 %v1170, %v1167
    %v1279 = vpack.c.b16 %v1171, %v1168
    %v1280 = vpack.c.b16 %v1175, %v1172
    %v1281 = vpack.c.b16 %v1176, %v1173
    %v1282 = vpack.c.b16 %v1177, %v1174
    %v1283 = vpack.c.b16 %v1181, %v1178
    %v1284 = vpack.c.b16 %v1182, %v1179
    %v1285 = vpack.c.b16 %v1183, %v1180
    %v1286 = vpack.c.b16 %v1187, %v1184
    %v1287 = vpack.c.b16 %v1188, %v1185
    %v1288 = vpack.c.b16 %v1189, %v1186
    %v1289 = vpack.c.b16 %v1193, %v1190
    %v1290 = vpack.c.b16 %v1194, %v1191
    %v1291 = vpack.c.b16 %v1195, %v1192
    %1388 = vmatprep.subr.bf16.mxu0 %v1197
    %1389 = vmatpush1.bf16.msra.mxu0 %v1196
    %1390 = vmatprep.subr.bf16.mxu0 %v1200
    %1391 = vmatpush1.bf16.msra.mxu0 %v1199
    %1392 = vmatprep.subr.bf16.mxu0 %v1203
    %1393 = vmatpush1.bf16.msra.mxu0 %v1202
    %1394 = vmatprep.subr.bf16.mxu0 %v1206
    %1395 = vmatpush1.bf16.msra.mxu0 %v1205
    %1396 = vmatprep.subr.bf16.mxu0 %v1209
    %1397 = vmatpush1.bf16.msra.mxu0 %v1208
    %1398 = vmatprep.subr.bf16.mxu0 %v1212
    %1399 = vmatpush1.bf16.msra.mxu0 %v1211
    %1400 = vmatprep.subr.bf16.mxu0 %v1215
    %1401 = vmatpush1.bf16.msra.mxu0 %v1214
    %1402 = vmatprep.subr.bf16.mxu0 %v1218
    %1403 = vmatpush1.bf16.msra.mxu0 %v1217
    %1404 = vmatprep.subr.bf16.mxu0 %v1221
    %1405 = vmatpush1.bf16.msra.mxu0 %v1220
    %1406 = vmatprep.subr.bf16.mxu0 %v1224
    %1407 = vmatpush1.bf16.msra.mxu0 %v1223
    %1408 = vmatprep.subr.bf16.mxu0 %v1227
    %1409 = vmatpush1.bf16.msra.mxu0 %v1226
    %1410 = vmatprep.subr.bf16.mxu0 %v1230
    %1411 = vmatpush1.bf16.msra.mxu0 %v1229
    %1412 = vmatprep.subr.bf16.mxu0 %v1233
    %1413 = vmatpush1.bf16.msra.mxu0 %v1232
    %1414 = vmatprep.subr.bf16.mxu0 %v1236
    %1415 = vmatpush1.bf16.msra.mxu0 %v1235
    %1416 = vmatprep.subr.bf16.mxu0 %v1239
    %1417 = vmatpush1.bf16.msra.mxu0 %v1238
    %1418 = vmatprep.subr.bf16.mxu0 %v1242
    %1419 = vmatpush1.bf16.msra.mxu0 %v1241
    %1420 = vmatprep.mubr.bf16.mxu0 %v686
    %1421 = vmatmul.mubr.bf16.gmra.mrb[0].mxu0 %v685
    %v1422 = vpop.f32.mrb[0].mxu0
    %v1423 = vadd.f32 %v864, %v1422
    %v1424 = vpop.f32.mrb[0].mxu0
    %v1425 = vadd.f32 %v868, %v1424
    %v1426 = vpop.f32.mrb[0].mxu0
    %v1427 = vadd.f32 %v864, %v1426
    %v1428 = vpop.f32.mrb[0].mxu0
    %v1429 = vadd.f32 %v868, %v1428
    %1430 = vdwg.mxu0
    %1431 = vmatprep.subr.bf16.mxu0 %v1245
    %1432 = vmatpush1.bf16.msra.mxu0 %v1244
    %1433 = vmatprep.subr.bf16.mxu0 %v1248
    %1434 = vmatpush1.bf16.msra.mxu0 %v1247
    %1435 = vmatprep.subr.bf16.mxu0 %v1251
    %1436 = vmatpush1.bf16.msra.mxu0 %v1250
    %1437 = vmatprep.subr.bf16.mxu0 %v1254
    %1438 = vmatpush1.bf16.msra.mxu0 %v1253
    %1439 = vmatprep.subr.bf16.mxu0 %v1257
    %1440 = vmatpush1.bf16.msra.mxu0 %v1256
    %1441 = vmatprep.subr.bf16.mxu0 %v1260
    %1442 = vmatpush1.bf16.msra.mxu0 %v1259
    %1443 = vmatprep.subr.bf16.mxu0 %v1263
    %1444 = vmatpush1.bf16.msra.mxu0 %v1262
    %1445 = vmatprep.subr.bf16.mxu0 %v1266
    %1446 = vmatpush1.bf16.msra.mxu0 %v1265
    %1447 = vmatprep.subr.bf16.mxu0 %v1269
    %1448 = vmatpush1.bf16.msra.mxu0 %v1268
    %1449 = vmatprep.subr.bf16.mxu0 %v1272
    %1450 = vmatpush1.bf16.msra.mxu0 %v1271
    %1451 = vmatprep.subr.bf16.mxu0 %v1275
    %1452 = vmatpush1.bf16.msra.mxu0 %v1274
    %1453 = vmatprep.subr.bf16.mxu0 %v1278
    %1454 = vmatpush1.bf16.msra.mxu0 %v1277
    %1455 = vmatprep.subr.bf16.mxu0 %v1281
    %1456 = vmatpush1.bf16.msra.mxu0 %v1280
    %1457 = vmatprep.subr.bf16.mxu0 %v1284
    %1458 = vmatpush1.bf16.msra.mxu0 %v1283
    %1459 = vmatprep.subr.bf16.mxu0 %v1287
    %1460 = vmatpush1.bf16.msra.mxu0 %v1286
    %1461 = vmatprep.subr.bf16.mxu0 %v1290
    %1462 = vmatpush1.bf16.msra.mxu0 %v1289
    %1463 = vmatprep.mubr.bf16.mxu0 %v688
    %1464 = vmatmul.mubr.bf16.gmra.mrb[0].mxu0 %v687
    %v1465 = vpop.f32.mrb[0].mxu0
    %v1466 = vadd.f32 %v1423, %v1465
    %v1467 = vpop.f32.mrb[0].mxu0
    %v1468 = vadd.f32 %v1425, %v1467
    %v1469 = vpop.f32.mrb[0].mxu0
    %v1470 = vadd.f32 %v1427, %v1469
    %v1471 = vpop.f32.mrb[0].mxu0
    %v1472 = vadd.f32 %v1429, %v1471
    %1473 = vdwg.mxu0
    %1474 = vmatprep.subr.bf16.mxu0 0
    %1475 = vmatpush1.bf16.msra.mxu0 %v1198
    %1476 = vmatprep.subr.bf16.mxu0 0
    %1477 = vmatpush1.bf16.msra.mxu0 %v1201
    %1478 = vmatprep.subr.bf16.mxu0 0
    %1479 = vmatpush1.bf16.msra.mxu0 %v1204
    %1480 = vmatprep.subr.bf16.mxu0 0
    %1481 = vmatpush1.bf16.msra.mxu0 %v1207
    %1482 = vmatprep.subr.bf16.mxu0 0
    %1483 = vmatpush1.bf16.msra.mxu0 %v1210
    %1484 = vmatprep.subr.bf16.mxu0 0
    %1485 = vmatpush1.bf16.msra.mxu0 %v1213
    %1486 = vmatprep.subr.bf16.mxu0 0
    %1487 = vmatpush1.bf16.msra.mxu0 %v1216
    %1488 = vmatprep.subr.bf16.mxu0 0
    %1489 = vmatpush1.bf16.msra.mxu0 %v1219
    %1490 = vmatprep.subr.bf16.mxu0 0
    %1491 = vmatpush1.bf16.msra.mxu0 %v1222
    %1492 = vmatprep.subr.bf16.mxu0 0
    %1493 = vmatpush1.bf16.msra.mxu0 %v1225
    %1494 = vmatprep.subr.bf16.mxu0 0
    %1495 = vmatpush1.bf16.msra.mxu0 %v1228
    %1496 = vmatprep.subr.bf16.mxu0 0
    %1497 = vmatpush1.bf16.msra.mxu0 %v1231
    %1498 = vmatprep.subr.bf16.mxu0 0
    %1499 = vmatpush1.bf16.msra.mxu0 %v1234
    %1500 = vmatprep.subr.bf16.mxu0 0
    %1501 = vmatpush1.bf16.msra.mxu0 %v1237
    %1502 = vmatprep.subr.bf16.mxu0 0
    %1503 = vmatpush1.bf16.msra.mxu0 %v1240
    %1504 = vmatprep.subr.bf16.mxu0 0
    %1505 = vmatpush1.bf16.msra.mxu0 %v1243
    %1506 = vmatprep.mubr.bf16.mxu0 %v686
    %1507 = vmatmul.mubr.bf16.gmra.mrb[0].mxu0 %v685
    %v1508 = vpop.f32.mrb[0].mxu0
    %v1509 = vadd.f32 %v872, %v1508
    %v1510 = vpop.f32.mrb[0].mxu0
    %v1511 = vpop.f32.mrb[0].mxu0
    %v1512 = vadd.f32 %v872, %v1511
    %v1513 = vpop.f32.mrb[0].mxu0
    %1514 = vdwg.mxu0
    %1515 = vmatprep.subr.bf16.mxu0 0
    %1516 = vmatpush1.bf16.msra.mxu0 %v1246
    %1517 = vmatprep.subr.bf16.mxu0 0
    %1518 = vmatpush1.bf16.msra.mxu0 %v1249
    %1519 = vmatprep.subr.bf16.mxu0 0
    %1520 = vmatpush1.bf16.msra.mxu0 %v1252
    %1521 = vmatprep.subr.bf16.mxu0 0
    %1522 = vmatpush1.bf16.msra.mxu0 %v1255
    %1523 = vmatprep.subr.bf16.mxu0 0
    %1524 = vmatpush1.bf16.msra.mxu0 %v1258
    %1525 = vmatprep.subr.bf16.mxu0 0
    %1526 = vmatpush1.bf16.msra.mxu0 %v1261
    %1527 = vmatprep.subr.bf16.mxu0 0
    %1528 = vmatpush1.bf16.msra.mxu0 %v1264
    %1529 = vmatprep.subr.bf16.mxu0 0
    %1530 = vmatpush1.bf16.msra.mxu0 %v1267
    %1531 = vmatprep.subr.bf16.mxu0 0
    %1532 = vmatpush1.bf16.msra.mxu0 %v1270
    %1533 = vmatprep.subr.bf16.mxu0 0
    %1534 = vmatpush1.bf16.msra.mxu0 %v1273
    %1535 = vmatprep.subr.bf16.mxu0 0
    %1536 = vmatpush1.bf16.msra.mxu0 %v1276
    %1537 = vmatprep.subr.bf16.mxu0 0
    %1538 = vmatpush1.bf16.msra.mxu0 %v1279
    %1539 = vmatprep.subr.bf16.mxu0 0
    %1540 = vmatpush1.bf16.msra.mxu0 %v1282
    %1541 = vmatprep.subr.bf16.mxu0 0
    %1542 = vmatpush1.bf16.msra.mxu0 %v1285
    %1543 = vmatprep.subr.bf16.mxu0 0
    %1544 = vmatpush1.bf16.msra.mxu0 %v1288
    %1545 = vmatprep.subr.bf16.mxu0 0
    %1546 = vmatpush1.bf16.msra.mxu0 %v1291
    %1547 = vmatprep.mubr.bf16.mxu0 %v688
    %1548 = vmatmul.mubr.bf16.gmra.mrb[0].mxu0 %v687
    %v1549 = vpop.f32.mrb[0].mxu0
    %v1550 = vadd.f32 %v1509, %v1549
    %v1551 = vpop.f32.mrb[0].mxu0
    %v1552 = vpop.f32.mrb[0].mxu0
    %v1553 = vadd.f32 %v1512, %v1552
    %v1554 = vpop.f32.mrb[0].mxu0
    %1555 = vdwg.mxu0
    %v1556 = vmax.f32 %v1466, 0.0
    %v1557 = vmax.f32 %v1468, 0.0
    %v1558 = vmax.f32 %v1550, 0.0
    %v1559 = vmax.f32 %v1470, 0.0
    %v1560 = vmax.f32 %v1472, 0.0
    %v1561 = vmax.f32 %v1553, 0.0
    %v1562 = vpack.c.bf16 %v1559, %v1556
    %v1563 = vpack.c.bf16 %v1560, %v1557
    %v1564 = vpack.c.bf16 %v1561, %v1558
    %v1565 = vld [vmem:[#allocation14] sm:$0xff]
    %v1566 = vld [vmem:[#allocation14 + $0x8] sm:$0xf]
    %v1567 = vld [vmem:[#allocation14 + $0xc] sm:$0xff]
    %v1568 = vld [vmem:[#allocation14 + $0x14] sm:$0xf]
    %v1569 = vld [vmem:[#allocation14 + $0x18] sm:$0xff]
    %v1570 = vld [vmem:[#allocation14 + $0x20] sm:$0xf]
    %v1571 = vld [vmem:[#allocation14 + $0x24] sm:$0xff]
    %v1572 = vld [vmem:[#allocation14 + $0x2c] sm:$0xf]
    %v1573 = vld [vmem:[#allocation14 + $0x30] sm:$0xff]
    %v1574 = vld [vmem:[#allocation14 + $0x38] sm:$0xf]
    %v1575 = vld [vmem:[#allocation14 + $0x3c] sm:$0xff]
    %v1576 = vld [vmem:[#allocation14 + $0x44] sm:$0xf]
    %v1577 = vld [vmem:[#allocation14 + $0x48] sm:$0xff]
    %v1578 = vld [vmem:[#allocation14 + $0x50] sm:$0xf]
    %v1579 = vld [vmem:[#allocation14 + $0x54] sm:$0xff]
    %v1580 = vld [vmem:[#allocation14 + $0x5c] sm:$0xf]
    %v1581 = vld [vmem:[#allocation14 + $0x60] sm:$0xff]
    %v1582 = vld [vmem:[#allocation14 + $0x68] sm:$0xf]
    %v1583 = vld [vmem:[#allocation14 + $0x6c] sm:$0xff]
    %v1584 = vld [vmem:[#allocation14 + $0x74] sm:$0xf]
    %v1585 = vld [vmem:[#allocation14 + $0x78] sm:$0xff]
    %v1586 = vld [vmem:[#allocation14 + $0x80] sm:$0xf]
    %v1587 = vld [vmem:[#allocation14 + $0x84] sm:$0xff]
    %v1588 = vld [vmem:[#allocation14 + $0x8c] sm:$0xf]
    %v1589 = vld [vmem:[#allocation14 + $0x90] sm:$0xff]
    %v1590 = vld [vmem:[#allocation14 + $0x98] sm:$0xf]
    %v1591 = vld [vmem:[#allocation14 + $0x9c] sm:$0xff]
    %v1592 = vld [vmem:[#allocation14 + $0xa4] sm:$0xf]
    %v1593 = vld [vmem:[#allocation14 + $0xa8] sm:$0xff]
    %v1594 = vld [vmem:[#allocation14 + $0xb0] sm:$0xf]
    %v1595 = vld [vmem:[#allocation14 + $0xb4] sm:$0xff]
    %v1596 = vld [vmem:[#allocation14 + $0xbc] sm:$0xf]
    %v1597 = vld [vmem:[#allocation14 + $0xc0] sm:$0xff]
    %v1598 = vld [vmem:[#allocation14 + $0xc8] sm:$0xf]
    %v1599 = vld [vmem:[#allocation14 + $0xcc] sm:$0xff]
    %v1600 = vld [vmem:[#allocation14 + $0xd4] sm:$0xf]
    %v1601 = vld [vmem:[#allocation14 + $0xd8] sm:$0xff]
    %v1602 = vld [vmem:[#allocation14 + $0xe0] sm:$0xf]
    %v1603 = vld [vmem:[#allocation14 + $0xe4] sm:$0xff]
    %v1604 = vld [vmem:[#allocation14 + $0xec] sm:$0xf]
    %v1605 = vld [vmem:[#allocation14 + $0xf0] sm:$0xff]
    %v1606 = vld [vmem:[#allocation14 + $0xf8] sm:$0xf]
    %v1607 = vld [vmem:[#allocation14 + $0xfc] sm:$0xff]
    %v1608 = vld [vmem:[#allocation14 + $0x104] sm:$0xf]
    %v1609 = vld [vmem:[#allocation14 + $0x108] sm:$0xff]
    %v1610 = vld [vmem:[#allocation14 + $0x110] sm:$0xf]
    %v1611 = vld [vmem:[#allocation14 + $0x114] sm:$0xff]
    %v1612 = vld [vmem:[#allocation14 + $0x11c] sm:$0xf]
    %v1613 = vld [vmem:[#allocation14 + $0x120] sm:$0xff]
    %v1614 = vld [vmem:[#allocation14 + $0x128] sm:$0xf]
    %v1615 = vld [vmem:[#allocation14 + $0x12c] sm:$0xff]
    %v1616 = vld [vmem:[#allocation14 + $0x134] sm:$0xf]
    %v1617 = vld [vmem:[#allocation14 + $0x138] sm:$0xff]
    %v1618 = vld [vmem:[#allocation14 + $0x140] sm:$0xf]
    %v1619 = vld [vmem:[#allocation14 + $0x144] sm:$0xff]
    %v1620 = vld [vmem:[#allocation14 + $0x14c] sm:$0xf]
    %v1621 = vld [vmem:[#allocation14 + $0x150] sm:$0xff]
    %v1622 = vld [vmem:[#allocation14 + $0x158] sm:$0xf]
    %v1623 = vld [vmem:[#allocation14 + $0x15c] sm:$0xff]
    %v1624 = vld [vmem:[#allocation14 + $0x164] sm:$0xf]
    %v1625 = vld [vmem:[#allocation14 + $0x168] sm:$0xff]
    %v1626 = vld [vmem:[#allocation14 + $0x170] sm:$0xf]
    %v1627 = vld [vmem:[#allocation14 + $0x174] sm:$0xff]
    %v1628 = vld [vmem:[#allocation14 + $0x17c] sm:$0xf]
    %v1629 = vld [vmem:[#allocation14 + $0x180] sm:$0xff]
    %v1630 = vld [vmem:[#allocation14 + $0x188] sm:$0xf]
    %v1631 = vld [vmem:[#allocation14 + $0x18c] sm:$0xff]
    %v1632 = vld [vmem:[#allocation14 + $0x194] sm:$0xf]
    %v1633 = vld [vmem:[#allocation14 + $0x198] sm:$0xff]
    %v1634 = vld [vmem:[#allocation14 + $0x1a0] sm:$0xf]
    %v1635 = vld [vmem:[#allocation14 + $0x1a4] sm:$0xff]
    %v1636 = vld [vmem:[#allocation14 + $0x1ac] sm:$0xf]
    %v1637 = vld [vmem:[#allocation14 + $0x1b0] sm:$0xff]
    %v1638 = vld [vmem:[#allocation14 + $0x1b8] sm:$0xf]
    %v1639 = vld [vmem:[#allocation14 + $0x1bc] sm:$0xff]
    %v1640 = vld [vmem:[#allocation14 + $0x1c4] sm:$0xf]
    %v1641 = vld [vmem:[#allocation14 + $0x1c8] sm:$0xff]
    %v1642 = vld [vmem:[#allocation14 + $0x1d0] sm:$0xf]
    %v1643 = vld [vmem:[#allocation14 + $0x1d4] sm:$0xff]
    %v1644 = vld [vmem:[#allocation14 + $0x1dc] sm:$0xf]
    %v1645 = vld [vmem:[#allocation14 + $0x1e0] sm:$0xff]
    %v1646 = vld [vmem:[#allocation14 + $0x1e8] sm:$0xf]
    %v1647 = vld [vmem:[#allocation14 + $0x1ec] sm:$0xff]
    %v1648 = vld [vmem:[#allocation14 + $0x1f4] sm:$0xf]
    %v1649 = vld [vmem:[#allocation14 + $0x1f8] sm:$0xff]
    %v1650 = vld [vmem:[#allocation14 + $0x200] sm:$0xf]
    %v1651 = vld [vmem:[#allocation14 + $0x204] sm:$0xff]
    %v1652 = vld [vmem:[#allocation14 + $0x20c] sm:$0xf]
    %v1653 = vld [vmem:[#allocation14 + $0x210] sm:$0xff]
    %v1654 = vld [vmem:[#allocation14 + $0x218] sm:$0xf]
    %v1655 = vld [vmem:[#allocation14 + $0x21c] sm:$0xff]
    %v1656 = vld [vmem:[#allocation14 + $0x224] sm:$0xf]
    %v1657 = vld [vmem:[#allocation14 + $0x228] sm:$0xff]
    %v1658 = vld [vmem:[#allocation14 + $0x230] sm:$0xf]
    %v1659 = vld [vmem:[#allocation14 + $0x234] sm:$0xff]
    %v1660 = vld [vmem:[#allocation14 + $0x23c] sm:$0xf]
    %v1661 = vld [vmem:[#allocation14 + $0x240] sm:$0xff]
    %v1662 = vld [vmem:[#allocation14 + $0x248] sm:$0xf]
    %v1663 = vld [vmem:[#allocation14 + $0x24c] sm:$0xff]
    %v1664 = vld [vmem:[#allocation14 + $0x254] sm:$0xf]
    %v1665 = vld [vmem:[#allocation14 + $0x258] sm:$0xff]
    %v1666 = vld [vmem:[#allocation14 + $0x260] sm:$0xf]
    %v1667 = vld [vmem:[#allocation14 + $0x264] sm:$0xff]
    %v1668 = vld [vmem:[#allocation14 + $0x26c] sm:$0xf]
    %v1669 = vld [vmem:[#allocation14 + $0x270] sm:$0xff]
    %v1670 = vld [vmem:[#allocation14 + $0x278] sm:$0xf]
    %v1671 = vld [vmem:[#allocation14 + $0x27c] sm:$0xff]
    %v1672 = vld [vmem:[#allocation14 + $0x284] sm:$0xf]
    %v1673 = vld [vmem:[#allocation14 + $0x288] sm:$0xff]
    %v1674 = vld [vmem:[#allocation14 + $0x290] sm:$0xf]
    %v1675 = vld [vmem:[#allocation14 + $0x294] sm:$0xff]
    %v1676 = vld [vmem:[#allocation14 + $0x29c] sm:$0xf]
    %v1677 = vld [vmem:[#allocation14 + $0x2a0] sm:$0xff]
    %v1678 = vld [vmem:[#allocation14 + $0x2a8] sm:$0xf]
    %v1679 = vld [vmem:[#allocation14 + $0x2ac] sm:$0xff]
    %v1680 = vld [vmem:[#allocation14 + $0x2b4] sm:$0xf]
    %v1681 = vld [vmem:[#allocation14 + $0x2b8] sm:$0xff]
    %v1682 = vld [vmem:[#allocation14 + $0x2c0] sm:$0xf]
    %v1683 = vld [vmem:[#allocation14 + $0x2c4] sm:$0xff]
    %v1684 = vld [vmem:[#allocation14 + $0x2cc] sm:$0xf]
    %v1685 = vld [vmem:[#allocation14 + $0x2d0] sm:$0xff]
    %v1686 = vld [vmem:[#allocation14 + $0x2d8] sm:$0xf]
    %v1687 = vld [vmem:[#allocation14 + $0x2dc] sm:$0xff]
    %v1688 = vld [vmem:[#allocation14 + $0x2e4] sm:$0xf]
    %v1689 = vld [vmem:[#allocation14 + $0x2e8] sm:$0xff]
    %v1690 = vld [vmem:[#allocation14 + $0x2f0] sm:$0xf]
    %v1691 = vld [vmem:[#allocation14 + $0x2f4] sm:$0xff]
    %v1692 = vld [vmem:[#allocation14 + $0x2fc] sm:$0xf]
    %v1693 = vld [vmem:[#allocation16] sm:$0x7]
    %v1695 = vlaneseq
    %v1696 = vshrl.u32 %v1695, 7
    %v1697 = vsub.s32 0, %v1696
    %v1698 = vrot.slane %v1693, %v1697
    %v1699 = vlaneseq
    %v1700 = vshrl.u32 %v1699, 7
    %v1701 = vsub.s32 1, %v1700
    %v1702 = vrot.slane %v1693, %v1701
    %v1703 = vlaneseq
    %v1704 = vshrl.u32 %v1703, 7
    %v1705 = vsub.s32 2, %v1704
    %v1706 = vrot.slane %v1693, %v1705
    %v1838 = vunpack.c.l.b16 %v1565
    %v1839 = vunpack.c.h.b16 %v1565
    %v1840 = vunpack.c.l.b16 %v1566
    %v1841 = vunpack.c.l.b16 %v1567
    %v1842 = vunpack.c.h.b16 %v1567
    %v1843 = vunpack.c.l.b16 %v1568
    %v1844 = vunpack.c.l.b16 %v1569
    %v1845 = vunpack.c.h.b16 %v1569
    %v1846 = vunpack.c.l.b16 %v1570
    %v1847 = vunpack.c.l.b16 %v1571
    %v1848 = vunpack.c.h.b16 %v1571
    %v1849 = vunpack.c.l.b16 %v1572
    %v1850 = vunpack.c.l.b16 %v1573
    %v1851 = vunpack.c.h.b16 %v1573
    %v1852 = vunpack.c.l.b16 %v1574
    %v1853 = vunpack.c.l.b16 %v1575
    %v1854 = vunpack.c.h.b16 %v1575
    %v1855 = vunpack.c.l.b16 %v1576
    %v1856 = vunpack.c.l.b16 %v1577
    %v1857 = vunpack.c.h.b16 %v1577
    %v1858 = vunpack.c.l.b16 %v1578
    %v1859 = vunpack.c.l.b16 %v1579
    %v1860 = vunpack.c.h.b16 %v1579
    %v1861 = vunpack.c.l.b16 %v1580
    %v1862 = vunpack.c.l.b16 %v1581
    %v1863 = vunpack.c.h.b16 %v1581
    %v1864 = vunpack.c.l.b16 %v1582
    %v1865 = vunpack.c.l.b16 %v1583
    %v1866 = vunpack.c.h.b16 %v1583
    %v1867 = vunpack.c.l.b16 %v1584
    %v1868 = vunpack.c.l.b16 %v1585
    %v1869 = vunpack.c.h.b16 %v1585
    %v1870 = vunpack.c.l.b16 %v1586
    %v1871 = vunpack.c.l.b16 %v1587
    %v1872 = vunpack.c.h.b16 %v1587
    %v1873 = vunpack.c.l.b16 %v1588
    %v1874 = vunpack.c.l.b16 %v1589
    %v1875 = vunpack.c.h.b16 %v1589
    %v1876 = vunpack.c.l.b16 %v1590
    %v1877 = vunpack.c.l.b16 %v1591
    %v1878 = vunpack.c.h.b16 %v1591
    %v1879 = vunpack.c.l.b16 %v1592
    %v1880 = vunpack.c.l.b16 %v1593
    %v1881 = vunpack.c.h.b16 %v1593
    %v1882 = vunpack.c.l.b16 %v1594
    %v1883 = vunpack.c.l.b16 %v1595
    %v1884 = vunpack.c.h.b16 %v1595
    %v1885 = vunpack.c.l.b16 %v1596
    %v1886 = vunpack.c.l.b16 %v1597
    %v1887 = vunpack.c.h.b16 %v1597
    %v1888 = vunpack.c.l.b16 %v1598
    %v1889 = vunpack.c.l.b16 %v1599
    %v1890 = vunpack.c.h.b16 %v1599
    %v1891 = vunpack.c.l.b16 %v1600
    %v1892 = vunpack.c.l.b16 %v1601
    %v1893 = vunpack.c.h.b16 %v1601
    %v1894 = vunpack.c.l.b16 %v1602
    %v1895 = vunpack.c.l.b16 %v1603
    %v1896 = vunpack.c.h.b16 %v1603
    %v1897 = vunpack.c.l.b16 %v1604
    %v1898 = vunpack.c.l.b16 %v1605
    %v1899 = vunpack.c.h.b16 %v1605
    %v1900 = vunpack.c.l.b16 %v1606
    %v1901 = vunpack.c.l.b16 %v1607
    %v1902 = vunpack.c.h.b16 %v1607
    %v1903 = vunpack.c.l.b16 %v1608
    %v1904 = vunpack.c.l.b16 %v1609
    %v1905 = vunpack.c.h.b16 %v1609
    %v1906 = vunpack.c.l.b16 %v1610
    %v1907 = vunpack.c.l.b16 %v1611
    %v1908 = vunpack.c.h.b16 %v1611
    %v1909 = vunpack.c.l.b16 %v1612
    %v1910 = vunpack.c.l.b16 %v1613
    %v1911 = vunpack.c.h.b16 %v1613
    %v1912 = vunpack.c.l.b16 %v1614
    %v1913 = vunpack.c.l.b16 %v1615
    %v1914 = vunpack.c.h.b16 %v1615
    %v1915 = vunpack.c.l.b16 %v1616
    %v1916 = vunpack.c.l.b16 %v1617
    %v1917 = vunpack.c.h.b16 %v1617
    %v1918 = vunpack.c.l.b16 %v1618
    %v1919 = vunpack.c.l.b16 %v1619
    %v1920 = vunpack.c.h.b16 %v1619
    %v1921 = vunpack.c.l.b16 %v1620
    %v1922 = vunpack.c.l.b16 %v1621
    %v1923 = vunpack.c.h.b16 %v1621
    %v1924 = vunpack.c.l.b16 %v1622
    %v1925 = vunpack.c.l.b16 %v1623
    %v1926 = vunpack.c.h.b16 %v1623
    %v1927 = vunpack.c.l.b16 %v1624
    %v1928 = vunpack.c.l.b16 %v1625
    %v1929 = vunpack.c.h.b16 %v1625
    %v1930 = vunpack.c.l.b16 %v1626
    %v1931 = vunpack.c.l.b16 %v1627
    %v1932 = vunpack.c.h.b16 %v1627
    %v1933 = vunpack.c.l.b16 %v1628
    %v1934 = vunpack.c.l.b16 %v1629
    %v1935 = vunpack.c.h.b16 %v1629
    %v1936 = vunpack.c.l.b16 %v1630
    %v1937 = vunpack.c.l.b16 %v1631
    %v1938 = vunpack.c.h.b16 %v1631
    %v1939 = vunpack.c.l.b16 %v1632
    %v1940 = vunpack.c.l.b16 %v1633
    %v1941 = vunpack.c.h.b16 %v1633
    %v1942 = vunpack.c.l.b16 %v1634
    %v1943 = vunpack.c.l.b16 %v1635
    %v1944 = vunpack.c.h.b16 %v1635
    %v1945 = vunpack.c.l.b16 %v1636
    %v1946 = vunpack.c.l.b16 %v1637
    %v1947 = vunpack.c.h.b16 %v1637
    %v1948 = vunpack.c.l.b16 %v1638
    %v1949 = vunpack.c.l.b16 %v1639
    %v1950 = vunpack.c.h.b16 %v1639
    %v1951 = vunpack.c.l.b16 %v1640
    %v1952 = vunpack.c.l.b16 %v1641
    %v1953 = vunpack.c.h.b16 %v1641
    %v1954 = vunpack.c.l.b16 %v1642
    %v1955 = vunpack.c.l.b16 %v1643
    %v1956 = vunpack.c.h.b16 %v1643
    %v1957 = vunpack.c.l.b16 %v1644
    %v1958 = vunpack.c.l.b16 %v1645
    %v1959 = vunpack.c.h.b16 %v1645
    %v1960 = vunpack.c.l.b16 %v1646
    %v1961 = vunpack.c.l.b16 %v1647
    %v1962 = vunpack.c.h.b16 %v1647
    %v1963 = vunpack.c.l.b16 %v1648
    %v1964 = vunpack.c.l.b16 %v1649
    %v1965 = vunpack.c.h.b16 %v1649
    %v1966 = vunpack.c.l.b16 %v1650
    %v1967 = vunpack.c.l.b16 %v1651
    %v1968 = vunpack.c.h.b16 %v1651
    %v1969 = vunpack.c.l.b16 %v1652
    %v1970 = vunpack.c.l.b16 %v1653
    %v1971 = vunpack.c.h.b16 %v1653
    %v1972 = vunpack.c.l.b16 %v1654
    %v1973 = vunpack.c.l.b16 %v1655
    %v1974 = vunpack.c.h.b16 %v1655
    %v1975 = vunpack.c.l.b16 %v1656
    %v1976 = vunpack.c.l.b16 %v1657
    %v1977 = vunpack.c.h.b16 %v1657
    %v1978 = vunpack.c.l.b16 %v1658
    %v1979 = vunpack.c.l.b16 %v1659
    %v1980 = vunpack.c.h.b16 %v1659
    %v1981 = vunpack.c.l.b16 %v1660
    %v1982 = vunpack.c.l.b16 %v1661
    %v1983 = vunpack.c.h.b16 %v1661
    %v1984 = vunpack.c.l.b16 %v1662
    %v1985 = vunpack.c.l.b16 %v1663
    %v1986 = vunpack.c.h.b16 %v1663
    %v1987 = vunpack.c.l.b16 %v1664
    %v1988 = vunpack.c.l.b16 %v1665
    %v1989 = vunpack.c.h.b16 %v1665
    %v1990 = vunpack.c.l.b16 %v1666
    %v1991 = vunpack.c.l.b16 %v1667
    %v1992 = vunpack.c.h.b16 %v1667
    %v1993 = vunpack.c.l.b16 %v1668
    %v1994 = vunpack.c.l.b16 %v1669
    %v1995 = vunpack.c.h.b16 %v1669
    %v1996 = vunpack.c.l.b16 %v1670
    %v1997 = vunpack.c.l.b16 %v1671
    %v1998 = vunpack.c.h.b16 %v1671
    %v1999 = vunpack.c.l.b16 %v1672
    %v2000 = vunpack.c.l.b16 %v1673
    %v2001 = vunpack.c.h.b16 %v1673
    %v2002 = vunpack.c.l.b16 %v1674
    %v2003 = vunpack.c.l.b16 %v1675
    %v2004 = vunpack.c.h.b16 %v1675
    %v2005 = vunpack.c.l.b16 %v1676
    %v2006 = vunpack.c.l.b16 %v1677
    %v2007 = vunpack.c.h.b16 %v1677
    %v2008 = vunpack.c.l.b16 %v1678
    %v2009 = vunpack.c.l.b16 %v1679
    %v2010 = vunpack.c.h.b16 %v1679
    %v2011 = vunpack.c.l.b16 %v1680
    %v2012 = vunpack.c.l.b16 %v1681
    %v2013 = vunpack.c.h.b16 %v1681
    %v2014 = vunpack.c.l.b16 %v1682
    %v2015 = vunpack.c.l.b16 %v1683
    %v2016 = vunpack.c.h.b16 %v1683
    %v2017 = vunpack.c.l.b16 %v1684
    %v2018 = vunpack.c.l.b16 %v1685
    %v2019 = vunpack.c.h.b16 %v1685
    %v2020 = vunpack.c.l.b16 %v1686
    %v2021 = vunpack.c.l.b16 %v1687
    %v2022 = vunpack.c.h.b16 %v1687
    %v2023 = vunpack.c.l.b16 %v1688
    %v2024 = vunpack.c.l.b16 %v1689
    %v2025 = vunpack.c.h.b16 %v1689
    %v2026 = vunpack.c.l.b16 %v1690
    %v2027 = vunpack.c.l.b16 %v1691
    %v2028 = vunpack.c.h.b16 %v1691
    %v2029 = vunpack.c.l.b16 %v1692
    %v2030 = vpack.c.b16 %v1841, %v1838
    %v2031 = vpack.c.b16 %v1842, %v1839
    %v2032 = vpack.c.b16 %v1843, %v1840
    %v2033 = vpack.c.b16 %v1847, %v1844
    %v2034 = vpack.c.b16 %v1848, %v1845
    %v2035 = vpack.c.b16 %v1849, %v1846
    %v2036 = vpack.c.b16 %v1853, %v1850
    %v2037 = vpack.c.b16 %v1854, %v1851
    %v2038 = vpack.c.b16 %v1855, %v1852
    %v2039 = vpack.c.b16 %v1859, %v1856
    %v2040 = vpack.c.b16 %v1860, %v1857
    %v2041 = vpack.c.b16 %v1861, %v1858
    %v2042 = vpack.c.b16 %v1865, %v1862
    %v2043 = vpack.c.b16 %v1866, %v1863
    %v2044 = vpack.c.b16 %v1867, %v1864
    %v2045 = vpack.c.b16 %v1871, %v1868
    %v2046 = vpack.c.b16 %v1872, %v1869
    %v2047 = vpack.c.b16 %v1873, %v1870
    %v2048 = vpack.c.b16 %v1877, %v1874
    %v2049 = vpack.c.b16 %v1878, %v1875
    %v2050 = vpack.c.b16 %v1879, %v1876
    %v2051 = vpack.c.b16 %v1883, %v1880
    %v2052 = vpack.c.b16 %v1884, %v1881
    %v2053 = vpack.c.b16 %v1885, %v1882
    %v2054 = vpack.c.b16 %v1889, %v1886
    %v2055 = vpack.c.b16 %v1890, %v1887
    %v2056 = vpack.c.b16 %v1891, %v1888
    %v2057 = vpack.c.b16 %v1895, %v1892
    %v2058 = vpack.c.b16 %v1896, %v1893
    %v2059 = vpack.c.b16 %v1897, %v1894
    %v2060 = vpack.c.b16 %v1901, %v1898
    %v2061 = vpack.c.b16 %v1902, %v1899
    %v2062 = vpack.c.b16 %v1903, %v1900
    %v2063 = vpack.c.b16 %v1907, %v1904
    %v2064 = vpack.c.b16 %v1908, %v1905
    %v2065 = vpack.c.b16 %v1909, %v1906
    %v2066 = vpack.c.b16 %v1913, %v1910
    %v2067 = vpack.c.b16 %v1914, %v1911
    %v2068 = vpack.c.b16 %v1915, %v1912
    %v2069 = vpack.c.b16 %v1919, %v1916
    %v2070 = vpack.c.b16 %v1920, %v1917
    %v2071 = vpack.c.b16 %v1921, %v1918
    %v2072 = vpack.c.b16 %v1925, %v1922
    %v2073 = vpack.c.b16 %v1926, %v1923
    %v2074 = vpack.c.b16 %v1927, %v1924
    %v2075 = vpack.c.b16 %v1931, %v1928
    %v2076 = vpack.c.b16 %v1932, %v1929
    %v2077 = vpack.c.b16 %v1933, %v1930
    %v2078 = vpack.c.b16 %v1937, %v1934
    %v2079 = vpack.c.b16 %v1938, %v1935
    %v2080 = vpack.c.b16 %v1939, %v1936
    %v2081 = vpack.c.b16 %v1943, %v1940
    %v2082 = vpack.c.b16 %v1944, %v1941
    %v2083 = vpack.c.b16 %v1945, %v1942
    %v2084 = vpack.c.b16 %v1949, %v1946
    %v2085 = vpack.c.b16 %v1950, %v1947
    %v2086 = vpack.c.b16 %v1951, %v1948
    %v2087 = vpack.c.b16 %v1955, %v1952
    %v2088 = vpack.c.b16 %v1956, %v1953
    %v2089 = vpack.c.b16 %v1957, %v1954
    %v2090 = vpack.c.b16 %v1961, %v1958
    %v2091 = vpack.c.b16 %v1962, %v1959
    %v2092 = vpack.c.b16 %v1963, %v1960
    %v2093 = vpack.c.b16 %v1967, %v1964
    %v2094 = vpack.c.b16 %v1968, %v1965
    %v2095 = vpack.c.b16 %v1969, %v1966
    %v2096 = vpack.c.b16 %v1973, %v1970
    %v2097 = vpack.c.b16 %v1974, %v1971
    %v2098 = vpack.c.b16 %v1975, %v1972
    %v2099 = vpack.c.b16 %v1979, %v1976
    %v2100 = vpack.c.b16 %v1980, %v1977
    %v2101 = vpack.c.b16 %v1981, %v1978
    %v2102 = vpack.c.b16 %v1985, %v1982
    %v2103 = vpack.c.b16 %v1986, %v1983
    %v2104 = vpack.c.b16 %v1987, %v1984
    %v2105 = vpack.c.b16 %v1991, %v1988
    %v2106 = vpack.c.b16 %v1992, %v1989
    %v2107 = vpack.c.b16 %v1993, %v1990
    %v2108 = vpack.c.b16 %v1997, %v1994
    %v2109 = vpack.c.b16 %v1998, %v1995
    %v2110 = vpack.c.b16 %v1999, %v1996
    %v2111 = vpack.c.b16 %v2003, %v2000
    %v2112 = vpack.c.b16 %v2004, %v2001
    %v2113 = vpack.c.b16 %v2005, %v2002
    %v2114 = vpack.c.b16 %v2009, %v2006
    %v2115 = vpack.c.b16 %v2010, %v2007
    %v2116 = vpack.c.b16 %v2011, %v2008
    %v2117 = vpack.c.b16 %v2015, %v2012
    %v2118 = vpack.c.b16 %v2016, %v2013
    %v2119 = vpack.c.b16 %v2017, %v2014
    %v2120 = vpack.c.b16 %v2021, %v2018
    %v2121 = vpack.c.b16 %v2022, %v2019
    %v2122 = vpack.c.b16 %v2023, %v2020
    %v2123 = vpack.c.b16 %v2027, %v2024
    %v2124 = vpack.c.b16 %v2028, %v2025
    %v2125 = vpack.c.b16 %v2029, %v2026
    %2222 = vmatprep.subr.bf16.mxu0 %v2031
    %2223 = vmatpush1.bf16.msra.mxu0 %v2030
    %2224 = vmatprep.subr.bf16.mxu0 %v2034
    %2225 = vmatpush1.bf16.msra.mxu0 %v2033
    %2226 = vmatprep.subr.bf16.mxu0 %v2037
    %2227 = vmatpush1.bf16.msra.mxu0 %v2036
    %2228 = vmatprep.subr.bf16.mxu0 %v2040
    %2229 = vmatpush1.bf16.msra.mxu0 %v2039
    %2230 = vmatprep.subr.bf16.mxu0 %v2043
    %2231 = vmatpush1.bf16.msra.mxu0 %v2042
    %2232 = vmatprep.subr.bf16.mxu0 %v2046
    %2233 = vmatpush1.bf16.msra.mxu0 %v2045
    %2234 = vmatprep.subr.bf16.mxu0 %v2049
    %2235 = vmatpush1.bf16.msra.mxu0 %v2048
    %2236 = vmatprep.subr.bf16.mxu0 %v2052
    %2237 = vmatpush1.bf16.msra.mxu0 %v2051
    %2238 = vmatprep.subr.bf16.mxu0 %v2055
    %2239 = vmatpush1.bf16.msra.mxu0 %v2054
    %2240 = vmatprep.subr.bf16.mxu0 %v2058
    %2241 = vmatpush1.bf16.msra.mxu0 %v2057
    %2242 = vmatprep.subr.bf16.mxu0 %v2061
    %2243 = vmatpush1.bf16.msra.mxu0 %v2060
    %2244 = vmatprep.subr.bf16.mxu0 %v2064
    %2245 = vmatpush1.bf16.msra.mxu0 %v2063
    %2246 = vmatprep.subr.bf16.mxu0 %v2067
    %2247 = vmatpush1.bf16.msra.mxu0 %v2066
    %2248 = vmatprep.subr.bf16.mxu0 %v2070
    %2249 = vmatpush1.bf16.msra.mxu0 %v2069
    %2250 = vmatprep.subr.bf16.mxu0 %v2073
    %2251 = vmatpush1.bf16.msra.mxu0 %v2072
    %2252 = vmatprep.subr.bf16.mxu0 %v2076
    %2253 = vmatpush1.bf16.msra.mxu0 %v2075
    %2254 = vmatprep.mubr.bf16.mxu0 %v728
    %2255 = vmatmul.mubr.bf16.gmra.mrb[0].mxu0 %v727
    %v2256 = vpop.f32.mrb[0].mxu0
    %v2257 = vadd.f32 %v1698, %v2256
    %v2258 = vpop.f32.mrb[0].mxu0
    %v2259 = vadd.f32 %v1702, %v2258
    %v2260 = vpop.f32.mrb[0].mxu0
    %v2261 = vadd.f32 %v1698, %v2260
    %v2262 = vpop.f32.mrb[0].mxu0
    %v2263 = vadd.f32 %v1702, %v2262
    %2264 = vdwg.mxu0
    %2265 = vmatprep.subr.bf16.mxu0 %v2079
    %2266 = vmatpush1.bf16.msra.mxu0 %v2078
    %2267 = vmatprep.subr.bf16.mxu0 %v2082
    %2268 = vmatpush1.bf16.msra.mxu0 %v2081
    %2269 = vmatprep.subr.bf16.mxu0 %v2085
    %2270 = vmatpush1.bf16.msra.mxu0 %v2084
    %2271 = vmatprep.subr.bf16.mxu0 %v2088
    %2272 = vmatpush1.bf16.msra.mxu0 %v2087
    %2273 = vmatprep.subr.bf16.mxu0 %v2091
    %2274 = vmatpush1.bf16.msra.mxu0 %v2090
    %2275 = vmatprep.subr.bf16.mxu0 %v2094
    %2276 = vmatpush1.bf16.msra.mxu0 %v2093
    %2277 = vmatprep.subr.bf16.mxu0 %v2097
    %2278 = vmatpush1.bf16.msra.mxu0 %v2096
    %2279 = vmatprep.subr.bf16.mxu0 %v2100
    %2280 = vmatpush1.bf16.msra.mxu0 %v2099
    %2281 = vmatprep.subr.bf16.mxu0 %v2103
    %2282 = vmatpush1.bf16.msra.mxu0 %v2102
    %2283 = vmatprep.subr.bf16.mxu0 %v2106
    %2284 = vmatpush1.bf16.msra.mxu0 %v2105
    %2285 = vmatprep.subr.bf16.mxu0 %v2109
    %2286 = vmatpush1.bf16.msra.mxu0 %v2108
    %2287 = vmatprep.subr.bf16.mxu0 %v2112
    %2288 = vmatpush1.bf16.msra.mxu0 %v2111
    %2289 = vmatprep.subr.bf16.mxu0 %v2115
    %2290 = vmatpush1.bf16.msra.mxu0 %v2114
    %2291 = vmatprep.subr.bf16.mxu0 %v2118
    %2292 = vmatpush1.bf16.msra.mxu0 %v2117
    %2293 = vmatprep.subr.bf16.mxu0 %v2121
    %2294 = vmatpush1.bf16.msra.mxu0 %v2120
    %2295 = vmatprep.subr.bf16.mxu0 %v2124
    %2296 = vmatpush1.bf16.msra.mxu0 %v2123
    %2297 = vmatprep.mubr.bf16.mxu0 %v730
    %2298 = vmatmul.mubr.bf16.gmra.mrb[0].mxu0 %v729
    %v2299 = vpop.f32.mrb[0].mxu0
    %v2300 = vadd.f32 %v2257, %v2299
    %v2301 = vpop.f32.mrb[0].mxu0
    %v2302 = vadd.f32 %v2259, %v2301
    %v2303 = vpop.f32.mrb[0].mxu0
    %v2304 = vadd.f32 %v2261, %v2303
    %v2305 = vpop.f32.mrb[0].mxu0
    %v2306 = vadd.f32 %v2263, %v2305
    %2307 = vdwg.mxu0
    %2308 = vmatprep.subr.bf16.mxu0 0
    %2309 = vmatpush1.bf16.msra.mxu0 %v2032
    %2310 = vmatprep.subr.bf16.mxu0 0
    %2311 = vmatpush1.bf16.msra.mxu0 %v2035
    %2312 = vmatprep.subr.bf16.mxu0 0
    %2313 = vmatpush1.bf16.msra.mxu0 %v2038
    %2314 = vmatprep.subr.bf16.mxu0 0
    %2315 = vmatpush1.bf16.msra.mxu0 %v2041
    %2316 = vmatprep.subr.bf16.mxu0 0
    %2317 = vmatpush1.bf16.msra.mxu0 %v2044
    %2318 = vmatprep.subr.bf16.mxu0 0
    %2319 = vmatpush1.bf16.msra.mxu0 %v2047
    %2320 = vmatprep.subr.bf16.mxu0 0
    %2321 = vmatpush1.bf16.msra.mxu0 %v2050
    %2322 = vmatprep.subr.bf16.mxu0 0
    %2323 = vmatpush1.bf16.msra.mxu0 %v2053
    %2324 = vmatprep.subr.bf16.mxu0 0
    %2325 = vmatpush1.bf16.msra.mxu0 %v2056
    %2326 = vmatprep.subr.bf16.mxu0 0
    %2327 = vmatpush1.bf16.msra.mxu0 %v2059
    %2328 = vmatprep.subr.bf16.mxu0 0
    %2329 = vmatpush1.bf16.msra.mxu0 %v2062
    %2330 = vmatprep.subr.bf16.mxu0 0
    %2331 = vmatpush1.bf16.msra.mxu0 %v2065
    %2332 = vmatprep.subr.bf16.mxu0 0
    %2333 = vmatpush1.bf16.msra.mxu0 %v2068
    %2334 = vmatprep.subr.bf16.mxu0 0
    %2335 = vmatpush1.bf16.msra.mxu0 %v2071
    %2336 = vmatprep.subr.bf16.mxu0 0
    %2337 = vmatpush1.bf16.msra.mxu0 %v2074
    %2338 = vmatprep.subr.bf16.mxu0 0
    %2339 = vmatpush1.bf16.msra.mxu0 %v2077
    %2340 = vmatprep.mubr.bf16.mxu0 %v728
    %2341 = vmatmul.mubr.bf16.gmra.mrb[0].mxu0 %v727
    %v2342 = vpop.f32.mrb[0].mxu0
    %v2343 = vadd.f32 %v1706, %v2342
    %v2344 = vpop.f32.mrb[0].mxu0
    %v2345 = vpop.f32.mrb[0].mxu0
    %v2346 = vadd.f32 %v1706, %v2345
    %v2347 = vpop.f32.mrb[0].mxu0
    %2348 = vdwg.mxu0
    %2349 = vmatprep.subr.bf16.mxu0 0
    %2350 = vmatpush1.bf16.msra.mxu0 %v2080
    %2351 = vmatprep.subr.bf16.mxu0 0
    %2352 = vmatpush1.bf16.msra.mxu0 %v2083
    %2353 = vmatprep.subr.bf16.mxu0 0
    %2354 = vmatpush1.bf16.msra.mxu0 %v2086
    %2355 = vmatprep.subr.bf16.mxu0 0
    %2356 = vmatpush1.bf16.msra.mxu0 %v2089
    %2357 = vmatprep.subr.bf16.mxu0 0
    %2358 = vmatpush1.bf16.msra.mxu0 %v2092
    %2359 = vmatprep.subr.bf16.mxu0 0
    %2360 = vmatpush1.bf16.msra.mxu0 %v2095
    %2361 = vmatprep.subr.bf16.mxu0 0
    %2362 = vmatpush1.bf16.msra.mxu0 %v2098
    %2363 = vmatprep.subr.bf16.mxu0 0
    %2364 = vmatpush1.bf16.msra.mxu0 %v2101
    %2365 = vmatprep.subr.bf16.mxu0 0
    %2366 = vmatpush1.bf16.msra.mxu0 %v2104
    %2367 = vmatprep.subr.bf16.mxu0 0
    %2368 = vmatpush1.bf16.msra.mxu0 %v2107
    %2369 = vmatprep.subr.bf16.mxu0 0
    %2370 = vmatpush1.bf16.msra.mxu0 %v2110
    %2371 = vmatprep.subr.bf16.mxu0 0
    %2372 = vmatpush1.bf16.msra.mxu0 %v2113
    %2373 = vmatprep.subr.bf16.mxu0 0
    %2374 = vmatpush1.bf16.msra.mxu0 %v2116
    %2375 = vmatprep.subr.bf16.mxu0 0
    %2376 = vmatpush1.bf16.msra.mxu0 %v2119
    %2377 = vmatprep.subr.bf16.mxu0 0
    %2378 = vmatpush1.bf16.msra.mxu0 %v2122
    %2379 = vmatprep.subr.bf16.mxu0 0
    %2380 = vmatpush1.bf16.msra.mxu0 %v2125
    %2381 = vmatprep.mubr.bf16.mxu0 %v730
    %2382 = vmatmul.mubr.bf16.gmra.mrb[0].mxu0 %v729
    %v2383 = vpop.f32.mrb[0].mxu0
    %v2384 = vadd.f32 %v2343, %v2383
    %v2385 = vpop.f32.mrb[0].mxu0
    %v2386 = vpop.f32.mrb[0].mxu0
    %v2387 = vadd.f32 %v2346, %v2386
    %v2388 = vpop.f32.mrb[0].mxu0
    %2389 = vdwg.mxu0
    %v2390 = vmax.f32 %v2300, 0.0
    %v2391 = vmax.f32 %v2302, 0.0
    %v2392 = vmax.f32 %v2384, 0.0
    %v2393 = vmax.f32 %v2304, 0.0
    %v2394 = vmax.f32 %v2306, 0.0
    %v2395 = vmax.f32 %v2387, 0.0
    %v2396 = vpack.c.bf16 %v2393, %v2390
    %v2397 = vpack.c.bf16 %v2394, %v2391
    %v2398 = vpack.c.bf16 %v2395, %v2392
    %v2399 = vld [vmem:[#allocation17] sm:$0xf]
    %v2400 = vld [vmem:[#allocation17 + $0x4] sm:$0xf]
    %v2401 = vld [vmem:[#allocation17 + $0x8] sm:$0xf]
    %v2402 = vld [vmem:[#allocation17 + $0xc] sm:$0xf]
    %v2403 = vld [vmem:[#allocation17 + $0x10] sm:$0xf]
    %v2404 = vld [vmem:[#allocation17 + $0x14] sm:$0xf]
    %v2405 = vld [vmem:[#allocation17 + $0x18] sm:$0xf]
    %v2406 = vld [vmem:[#allocation17 + $0x1c] sm:$0xf]
    %v2407 = vld [vmem:[#allocation17 + $0x20] sm:$0xf]
    %v2408 = vld [vmem:[#allocation17 + $0x24] sm:$0xf]
    %v2409 = vld [vmem:[#allocation17 + $0x28] sm:$0xf]
    %v2410 = vld [vmem:[#allocation17 + $0x2c] sm:$0xf]
    %v2411 = vld [vmem:[#allocation17 + $0x30] sm:$0xf]
    %v2412 = vld [vmem:[#allocation17 + $0x34] sm:$0xf]
    %v2413 = vld [vmem:[#allocation17 + $0x38] sm:$0xf]
    %v2414 = vld [vmem:[#allocation17 + $0x3c] sm:$0xf]
    %v2415 = vld [vmem:[#allocation17 + $0x40] sm:$0xf]
    %v2416 = vld [vmem:[#allocation17 + $0x44] sm:$0xf]
    %v2417 = vld [vmem:[#allocation17 + $0x48] sm:$0xf]
    %v2418 = vld [vmem:[#allocation17 + $0x4c] sm:$0xf]
    %v2419 = vld [vmem:[#allocation17 + $0x50] sm:$0xf]
    %v2420 = vld [vmem:[#allocation17 + $0x54] sm:$0xf]
    %v2421 = vld [vmem:[#allocation17 + $0x58] sm:$0xf]
    %v2422 = vld [vmem:[#allocation17 + $0x5c] sm:$0xf]
    %v2423 = vld [vmem:[#allocation17 + $0x60] sm:$0xf]
    %v2424 = vld [vmem:[#allocation17 + $0x64] sm:$0xf]
    %v2425 = vld [vmem:[#allocation17 + $0x68] sm:$0xf]
    %v2426 = vld [vmem:[#allocation17 + $0x6c] sm:$0xf]
    %v2427 = vld [vmem:[#allocation17 + $0x70] sm:$0xf]
    %v2428 = vld [vmem:[#allocation17 + $0x74] sm:$0xf]
    %v2429 = vld [vmem:[#allocation17 + $0x78] sm:$0xf]
    %v2430 = vld [vmem:[#allocation17 + $0x7c] sm:$0xf]
    %v2431 = vld [vmem:[#allocation17 + $0x80] sm:$0xf]
    %v2432 = vld [vmem:[#allocation17 + $0x84] sm:$0xf]
    %v2433 = vld [vmem:[#allocation17 + $0x88] sm:$0xf]
    %v2434 = vld [vmem:[#allocation17 + $0x8c] sm:$0xf]
    %v2435 = vld [vmem:[#allocation17 + $0x90] sm:$0xf]
    %v2436 = vld [vmem:[#allocation17 + $0x94] sm:$0xf]
    %v2437 = vld [vmem:[#allocation17 + $0x98] sm:$0xf]
    %v2438 = vld [vmem:[#allocation17 + $0x9c] sm:$0xf]
    %v2439 = vld [vmem:[#allocation17 + $0xa0] sm:$0xf]
    %v2440 = vld [vmem:[#allocation17 + $0xa4] sm:$0xf]
    %v2441 = vld [vmem:[#allocation17 + $0xa8] sm:$0xf]
    %v2442 = vld [vmem:[#allocation17 + $0xac] sm:$0xf]
    %v2443 = vld [vmem:[#allocation17 + $0xb0] sm:$0xf]
    %v2444 = vld [vmem:[#allocation17 + $0xb4] sm:$0xf]
    %v2445 = vld [vmem:[#allocation17 + $0xb8] sm:$0xf]
    %v2446 = vld [vmem:[#allocation17 + $0xbc] sm:$0xf]
    %v2447 = vld [vmem:[#allocation17 + $0xc0] sm:$0xf]
    %v2448 = vld [vmem:[#allocation17 + $0xc4] sm:$0xf]
    %v2449 = vld [vmem:[#allocation17 + $0xc8] sm:$0xf]
    %v2450 = vld [vmem:[#allocation17 + $0xcc] sm:$0xf]
    %v2451 = vld [vmem:[#allocation17 + $0xd0] sm:$0xf]
    %v2452 = vld [vmem:[#allocation17 + $0xd4] sm:$0xf]
    %v2453 = vld [vmem:[#allocation17 + $0xd8] sm:$0xf]
    %v2454 = vld [vmem:[#allocation17 + $0xdc] sm:$0xf]
    %v2455 = vld [vmem:[#allocation17 + $0xe0] sm:$0xf]
    %v2456 = vld [vmem:[#allocation17 + $0xe4] sm:$0xf]
    %v2457 = vld [vmem:[#allocation17 + $0xe8] sm:$0xf]
    %v2458 = vld [vmem:[#allocation17 + $0xec] sm:$0xf]
    %v2459 = vld [vmem:[#allocation17 + $0xf0] sm:$0xf]
    %v2460 = vld [vmem:[#allocation17 + $0xf4] sm:$0xf]
    %v2461 = vld [vmem:[#allocation17 + $0xf8] sm:$0xf]
    %v2462 = vld [vmem:[#allocation17 + $0xfc] sm:$0xf]
    %v2463 = vld [vmem:[#allocation17 + $0x100] sm:$0xf]
    %v2464 = vld [vmem:[#allocation17 + $0x104] sm:$0xf]
    %v2465 = vld [vmem:[#allocation17 + $0x108] sm:$0xf]
    %v2466 = vld [vmem:[#allocation17 + $0x10c] sm:$0xf]
    %v2467 = vld [vmem:[#allocation17 + $0x110] sm:$0xf]
    %v2468 = vld [vmem:[#allocation17 + $0x114] sm:$0xf]
    %v2469 = vld [vmem:[#allocation17 + $0x118] sm:$0xf]
    %v2470 = vld [vmem:[#allocation17 + $0x11c] sm:$0xf]
    %v2471 = vld [vmem:[#allocation17 + $0x120] sm:$0xf]
    %v2472 = vld [vmem:[#allocation17 + $0x124] sm:$0xf]
    %v2473 = vld [vmem:[#allocation17 + $0x128] sm:$0xf]
    %v2474 = vld [vmem:[#allocation17 + $0x12c] sm:$0xf]
    %v2475 = vld [vmem:[#allocation17 + $0x130] sm:$0xf]
    %v2476 = vld [vmem:[#allocation17 + $0x134] sm:$0xf]
    %v2477 = vld [vmem:[#allocation17 + $0x138] sm:$0xf]
    %v2478 = vld [vmem:[#allocation17 + $0x13c] sm:$0xf]
    %v2479 = vld [vmem:[#allocation17 + $0x140] sm:$0xf]
    %v2480 = vld [vmem:[#allocation17 + $0x144] sm:$0xf]
    %v2481 = vld [vmem:[#allocation17 + $0x148] sm:$0xf]
    %v2482 = vld [vmem:[#allocation17 + $0x14c] sm:$0xf]
    %v2483 = vld [vmem:[#allocation17 + $0x150] sm:$0xf]
    %v2484 = vld [vmem:[#allocation17 + $0x154] sm:$0xf]
    %v2485 = vld [vmem:[#allocation17 + $0x158] sm:$0xf]
    %v2486 = vld [vmem:[#allocation17 + $0x15c] sm:$0xf]
    %v2487 = vld [vmem:[#allocation17 + $0x160] sm:$0xf]
    %v2488 = vld [vmem:[#allocation17 + $0x164] sm:$0xf]
    %v2489 = vld [vmem:[#allocation17 + $0x168] sm:$0xf]
    %v2490 = vld [vmem:[#allocation17 + $0x16c] sm:$0xf]
    %v2491 = vld [vmem:[#allocation17 + $0x170] sm:$0xf]
    %v2492 = vld [vmem:[#allocation17 + $0x174] sm:$0xf]
    %v2493 = vld [vmem:[#allocation17 + $0x178] sm:$0xf]
    %v2494 = vld [vmem:[#allocation17 + $0x17c] sm:$0xf]
    %v2543 = vunpack.c.l.b16 %v2447
    %v2544 = vunpack.c.l.b16 %v2448
    %v2545 = vunpack.c.l.b16 %v2449
    %v2546 = vunpack.c.l.b16 %v2450
    %v2547 = vunpack.c.l.b16 %v2451
    %v2548 = vunpack.c.l.b16 %v2452
    %v2549 = vunpack.c.l.b16 %v2453
    %v2550 = vunpack.c.l.b16 %v2454
    %v2551 = vunpack.c.l.b16 %v2455
    %v2552 = vunpack.c.l.b16 %v2456
    %v2553 = vunpack.c.l.b16 %v2457
    %v2554 = vunpack.c.l.b16 %v2458
    %v2555 = vunpack.c.l.b16 %v2459
    %v2556 = vunpack.c.l.b16 %v2460
    %v2557 = vunpack.c.l.b16 %v2461
    %v2558 = vunpack.c.l.b16 %v2462
    %v2559 = vunpack.c.l.b16 %v2463
    %v2560 = vunpack.c.l.b16 %v2464
    %v2561 = vunpack.c.l.b16 %v2465
    %v2562 = vunpack.c.l.b16 %v2466
    %v2563 = vunpack.c.l.b16 %v2467
    %v2564 = vunpack.c.l.b16 %v2468
    %v2565 = vunpack.c.l.b16 %v2469
    %v2566 = vunpack.c.l.b16 %v2470
    %v2567 = vunpack.c.l.b16 %v2471
    %v2568 = vunpack.c.l.b16 %v2472
    %v2569 = vunpack.c.l.b16 %v2473
    %v2570 = vunpack.c.l.b16 %v2474
    %v2571 = vunpack.c.l.b16 %v2475
    %v2572 = vunpack.c.l.b16 %v2476
    %v2573 = vunpack.c.l.b16 %v2477
    %v2574 = vunpack.c.l.b16 %v2478
    %v2575 = vunpack.c.l.b16 %v2479
    %v2576 = vunpack.c.l.b16 %v2480
    %v2577 = vunpack.c.l.b16 %v2481
    %v2578 = vunpack.c.l.b16 %v2482
    %v2579 = vunpack.c.l.b16 %v2483
    %v2580 = vunpack.c.l.b16 %v2484
    %v2581 = vunpack.c.l.b16 %v2485
    %v2582 = vunpack.c.l.b16 %v2486
    %v2583 = vunpack.c.l.b16 %v2487
    %v2584 = vunpack.c.l.b16 %v2488
    %v2585 = vunpack.c.l.b16 %v2489
    %v2586 = vunpack.c.l.b16 %v2490
    %v2587 = vunpack.c.l.b16 %v2491
    %v2588 = vunpack.c.l.b16 %v2492
    %v2589 = vunpack.c.l.b16 %v2493
    %v2590 = vunpack.c.l.b16 %v2494
    %v2591 = vpack.c.b16 %v2544, %v2543
    %v2592 = vpack.c.b16 %v2546, %v2545
    %v2593 = vpack.c.b16 %v2548, %v2547
    %v2594 = vpack.c.b16 %v2550, %v2549
    %v2595 = vpack.c.b16 %v2552, %v2551
    %v2596 = vpack.c.b16 %v2554, %v2553
    %v2597 = vpack.c.b16 %v2556, %v2555
    %v2598 = vpack.c.b16 %v2558, %v2557
    %v2599 = vpack.c.b16 %v2560, %v2559
    %v2600 = vpack.c.b16 %v2562, %v2561
    %v2601 = vpack.c.b16 %v2564, %v2563
    %v2602 = vpack.c.b16 %v2566, %v2565
    %v2603 = vpack.c.b16 %v2568, %v2567
    %v2604 = vpack.c.b16 %v2570, %v2569
    %v2605 = vpack.c.b16 %v2572, %v2571
    %v2606 = vpack.c.b16 %v2574, %v2573
    %v2607 = vpack.c.b16 %v2576, %v2575
    %v2608 = vpack.c.b16 %v2578, %v2577
    %v2609 = vpack.c.b16 %v2580, %v2579
    %v2610 = vpack.c.b16 %v2582, %v2581
    %v2611 = vpack.c.b16 %v2584, %v2583
    %v2612 = vpack.c.b16 %v2586, %v2585
    %v2613 = vpack.c.b16 %v2588, %v2587
    %v2614 = vpack.c.b16 %v2590, %v2589
    %2639 = vmatprep.subr.bf16.mxu0 0
    %2640 = vmatpush1.bf16.msra.mxu0 %v2591
    %2641 = vmatprep.subr.bf16.mxu0 0
    %2642 = vmatpush1.bf16.msra.mxu0 %v2592
    %2643 = vmatprep.subr.bf16.mxu0 0
    %2644 = vmatpush1.bf16.msra.mxu0 %v2593
    %2645 = vmatprep.subr.bf16.mxu0 0
    %2646 = vmatpush1.bf16.msra.mxu0 %v2594
    %2647 = vmatprep.subr.bf16.mxu0 0
    %2648 = vmatpush1.bf16.msra.mxu0 %v2595
    %2649 = vmatprep.subr.bf16.mxu0 0
    %2650 = vmatpush1.bf16.msra.mxu0 %v2596
    %2651 = vmatprep.subr.bf16.mxu0 0
    %2652 = vmatpush1.bf16.msra.mxu0 %v2597
    %2653 = vmatprep.subr.bf16.mxu0 0
    %2654 = vmatpush1.bf16.msra.mxu0 %v2598
    %2655 = vmatprep.subr.bf16.mxu0 0
    %2656 = vmatpush1.bf16.msra.mxu0 %v2599
    %2657 = vmatprep.subr.bf16.mxu0 0
    %2658 = vmatpush1.bf16.msra.mxu0 %v2600
    %2659 = vmatprep.subr.bf16.mxu0 0
    %2660 = vmatpush1.bf16.msra.mxu0 %v2601
    %2661 = vmatprep.subr.bf16.mxu0 0
    %2662 = vmatpush1.bf16.msra.mxu0 %v2602
    %2663 = vmatprep.subr.bf16.mxu0 0
    %2664 = vmatpush1.bf16.msra.mxu0 %v2603
    %2665 = vmatprep.subr.bf16.mxu0 0
    %2666 = vmatpush1.bf16.msra.mxu0 %v2604
    %2667 = vmatprep.subr.bf16.mxu0 0
    %2668 = vmatpush1.bf16.msra.mxu0 %v2605
    %2669 = vmatprep.subr.bf16.mxu0 0
    %2670 = vmatpush1.bf16.msra.mxu0 %v2606
    %2671 = vmatprep.mubr.bf16.mxu0 %v2397
    %2672 = vmatmul.mubr.bf16.gmra.mrb[0].mxu0 %v2396
    %v2673 = vpop.f32.mrb[0].mxu0
    %v2674 = vadd.f32 0.0, %v2673
    %v2675 = vpop.f32.mrb[0].mxu0
    %v2676 = vpop.f32.mrb[0].mxu0
    %v2677 = vadd.f32 0.0, %v2676
    %v2678 = vpop.f32.mrb[0].mxu0
    %2679 = vdwg.mxu0
    %2680 = vmatprep.subr.bf16.mxu0 0
    %2681 = vmatpush1.bf16.msra.mxu0 %v2607
    %2682 = vmatprep.subr.bf16.mxu0 0
    %2683 = vmatpush1.bf16.msra.mxu0 %v2608
    %2684 = vmatprep.subr.bf16.mxu0 0
    %2685 = vmatpush1.bf16.msra.mxu0 %v2609
    %2686 = vmatprep.subr.bf16.mxu0 0
    %2687 = vmatpush1.bf16.msra.mxu0 %v2610
    %2688 = vmatprep.subr.bf16.mxu0 0
    %2689 = vmatpush1.bf16.msra.mxu0 %v2611
    %2690 = vmatprep.subr.bf16.mxu0 0
    %2691 = vmatpush1.bf16.msra.mxu0 %v2612
    %2692 = vmatprep.subr.bf16.mxu0 0
    %2693 = vmatpush1.bf16.msra.mxu0 %v2613
    %2694 = vmatprep.subr.bf16.mxu0 0
    %2695 = vmatpush1.bf16.msra.mxu0 %v2614
    %2696 = vmatprep.subr.bf16.mxu0 0
    %2697 = vmatpush1.bf16.msra.mxu0 0
    %2698 = vmatprep.subr.bf16.mxu0 0
    %2699 = vmatpush1.bf16.msra.mxu0 0
    %2700 = vmatprep.subr.bf16.mxu0 0
    %2701 = vmatpush1.bf16.msra.mxu0 0
    %2702 = vmatprep.subr.bf16.mxu0 0
    %2703 = vmatpush1.bf16.msra.mxu0 0
    %2704 = vmatprep.subr.bf16.mxu0 0
    %2705 = vmatpush1.bf16.msra.mxu0 0
    %2706 = vmatprep.subr.bf16.mxu0 0
    %2707 = vmatpush1.bf16.msra.mxu0 0
    %2708 = vmatprep.subr.bf16.mxu0 0
    %2709 = vmatpush1.bf16.msra.mxu0 0
    %2710 = vmatprep.subr.bf16.mxu0 0
    %2711 = vmatpush1.bf16.msra.mxu0 0
    %2712 = vmatprep.mubr.bf16.mxu0 0
    %2713 = vmatmul.mubr.bf16.gmra.mrb[0].mxu0 %v2398
    %v2714 = vpop.f32.mrb[0].mxu0
    %v2715 = vadd.f32 %v2674, %v2714
    %v2716 = vpop.f32.mrb[0].mxu0
    %v2717 = vpop.f32.mrb[0].mxu0
    %v2718 = vadd.f32 %v2677, %v2717
    %v2719 = vpop.f32.mrb[0].mxu0
    %2720 = vdwg.mxu0
    %v2769 = vunpack.c.l.b16 %v2399
    %v2770 = vunpack.c.l.b16 %v2400
    %v2771 = vunpack.c.l.b16 %v2401
    %v2772 = vunpack.c.l.b16 %v2402
    %v2773 = vunpack.c.l.b16 %v2403
    %v2774 = vunpack.c.l.b16 %v2404
    %v2775 = vunpack.c.l.b16 %v2405
    %v2776 = vunpack.c.l.b16 %v2406
    %v2777 = vunpack.c.l.b16 %v2407
    %v2778 = vunpack.c.l.b16 %v2408
    %v2779 = vunpack.c.l.b16 %v2409
    %v2780 = vunpack.c.l.b16 %v2410
    %v2781 = vunpack.c.l.b16 %v2411
    %v2782 = vunpack.c.l.b16 %v2412
    %v2783 = vunpack.c.l.b16 %v2413
    %v2784 = vunpack.c.l.b16 %v2414
    %v2785 = vunpack.c.l.b16 %v2415
    %v2786 = vunpack.c.l.b16 %v2416
    %v2787 = vunpack.c.l.b16 %v2417
    %v2788 = vunpack.c.l.b16 %v2418
    %v2789 = vunpack.c.l.b16 %v2419
    %v2790 = vunpack.c.l.b16 %v2420
    %v2791 = vunpack.c.l.b16 %v2421
    %v2792 = vunpack.c.l.b16 %v2422
    %v2793 = vunpack.c.l.b16 %v2423
    %v2794 = vunpack.c.l.b16 %v2424
    %v2795 = vunpack.c.l.b16 %v2425
    %v2796 = vunpack.c.l.b16 %v2426
    %v2797 = vunpack.c.l.b16 %v2427
    %v2798 = vunpack.c.l.b16 %v2428
    %v2799 = vunpack.c.l.b16 %v2429
    %v2800 = vunpack.c.l.b16 %v2430
    %v2801 = vunpack.c.l.b16 %v2431
    %v2802 = vunpack.c.l.b16 %v2432
    %v2803 = vunpack.c.l.b16 %v2433
    %v2804 = vunpack.c.l.b16 %v2434
    %v2805 = vunpack.c.l.b16 %v2435
    %v2806 = vunpack.c.l.b16 %v2436
    %v2807 = vunpack.c.l.b16 %v2437
    %v2808 = vunpack.c.l.b16 %v2438
    %v2809 = vunpack.c.l.b16 %v2439
    %v2810 = vunpack.c.l.b16 %v2440
    %v2811 = vunpack.c.l.b16 %v2441
    %v2812 = vunpack.c.l.b16 %v2442
    %v2813 = vunpack.c.l.b16 %v2443
    %v2814 = vunpack.c.l.b16 %v2444
    %v2815 = vunpack.c.l.b16 %v2445
    %v2816 = vunpack.c.l.b16 %v2446
    %v2817 = vpack.c.b16 %v2770, %v2769
    %v2818 = vpack.c.b16 %v2772, %v2771
    %v2819 = vpack.c.b16 %v2774, %v2773
    %v2820 = vpack.c.b16 %v2776, %v2775
    %v2821 = vpack.c.b16 %v2778, %v2777
    %v2822 = vpack.c.b16 %v2780, %v2779
    %v2823 = vpack.c.b16 %v2782, %v2781
    %v2824 = vpack.c.b16 %v2784, %v2783
    %v2825 = vpack.c.b16 %v2786, %v2785
    %v2826 = vpack.c.b16 %v2788, %v2787
    %v2827 = vpack.c.b16 %v2790, %v2789
    %v2828 = vpack.c.b16 %v2792, %v2791
    %v2829 = vpack.c.b16 %v2794, %v2793
    %v2830 = vpack.c.b16 %v2796, %v2795
    %v2831 = vpack.c.b16 %v2798, %v2797
    %v2832 = vpack.c.b16 %v2800, %v2799
    %v2833 = vpack.c.b16 %v2802, %v2801
    %v2834 = vpack.c.b16 %v2804, %v2803
    %v2835 = vpack.c.b16 %v2806, %v2805
    %v2836 = vpack.c.b16 %v2808, %v2807
    %v2837 = vpack.c.b16 %v2810, %v2809
    %v2838 = vpack.c.b16 %v2812, %v2811
    %v2839 = vpack.c.b16 %v2814, %v2813
    %v2840 = vpack.c.b16 %v2816, %v2815
    %2865 = vmatprep.subr.bf16.mxu0 0
    %2866 = vmatpush1.bf16.msra.mxu0 %v2817
    %2867 = vmatprep.subr.bf16.mxu0 0
    %2868 = vmatpush1.bf16.msra.mxu0 %v2818
    %2869 = vmatprep.subr.bf16.mxu0 0
    %2870 = vmatpush1.bf16.msra.mxu0 %v2819
    %2871 = vmatprep.subr.bf16.mxu0 0
    %2872 = vmatpush1.bf16.msra.mxu0 %v2820
    %2873 = vmatprep.subr.bf16.mxu0 0
    %2874 = vmatpush1.bf16.msra.mxu0 %v2821
    %2875 = vmatprep.subr.bf16.mxu0 0
    %2876 = vmatpush1.bf16.msra.mxu0 %v2822
    %2877 = vmatprep.subr.bf16.mxu0 0
    %2878 = vmatpush1.bf16.msra.mxu0 %v2823
    %2879 = vmatprep.subr.bf16.mxu0 0
    %2880 = vmatpush1.bf16.msra.mxu0 %v2824
    %2881 = vmatprep.subr.bf16.mxu0 0
    %2882 = vmatpush1.bf16.msra.mxu0 %v2825
    %2883 = vmatprep.subr.bf16.mxu0 0
    %2884 = vmatpush1.bf16.msra.mxu0 %v2826
    %2885 = vmatprep.subr.bf16.mxu0 0
    %2886 = vmatpush1.bf16.msra.mxu0 %v2827
    %2887 = vmatprep.subr.bf16.mxu0 0
    %2888 = vmatpush1.bf16.msra.mxu0 %v2828
    %2889 = vmatprep.subr.bf16.mxu0 0
    %2890 = vmatpush1.bf16.msra.mxu0 %v2829
    %2891 = vmatprep.subr.bf16.mxu0 0
    %2892 = vmatpush1.bf16.msra.mxu0 %v2830
    %2893 = vmatprep.subr.bf16.mxu0 0
    %2894 = vmatpush1.bf16.msra.mxu0 %v2831
    %2895 = vmatprep.subr.bf16.mxu0 0
    %2896 = vmatpush1.bf16.msra.mxu0 %v2832
    %2897 = vmatprep.mubr.bf16.mxu0 %v1563
    %2898 = vmatmul.mubr.bf16.gmra.mrb[0].mxu0 %v1562
    %v2899 = vpop.f32.mrb[0].mxu0
    %v2900 = vadd.f32 %v2715, %v2899
    %v2901 = vpop.f32.mrb[0].mxu0
    %v2902 = vpop.f32.mrb[0].mxu0
    %v2903 = vadd.f32 %v2718, %v2902
    %v2904 = vpop.f32.mrb[0].mxu0
    %2905 = vdwg.mxu0
    %2906 = vmatprep.subr.bf16.mxu0 0
    %2907 = vmatpush1.bf16.msra.mxu0 %v2833
    %2908 = vmatprep.subr.bf16.mxu0 0
    %2909 = vmatpush1.bf16.msra.mxu0 %v2834
    %2910 = vmatprep.subr.bf16.mxu0 0
    %2911 = vmatpush1.bf16.msra.mxu0 %v2835
    %2912 = vmatprep.subr.bf16.mxu0 0
    %2913 = vmatpush1.bf16.msra.mxu0 %v2836
    %2914 = vmatprep.subr.bf16.mxu0 0
    %2915 = vmatpush1.bf16.msra.mxu0 %v2837
    %2916 = vmatprep.subr.bf16.mxu0 0
    %2917 = vmatpush1.bf16.msra.mxu0 %v2838
    %2918 = vmatprep.subr.bf16.mxu0 0
    %2919 = vmatpush1.bf16.msra.mxu0 %v2839
    %2920 = vmatprep.subr.bf16.mxu0 0
    %2921 = vmatpush1.bf16.msra.mxu0 %v2840
    %2922 = vmatprep.subr.bf16.mxu0 0
    %2923 = vmatpush1.bf16.msra.mxu0 0
    %2924 = vmatprep.subr.bf16.mxu0 0
    %2925 = vmatpush1.bf16.msra.mxu0 0
    %2926 = vmatprep.subr.bf16.mxu0 0
    %2927 = vmatpush1.bf16.msra.mxu0 0
    %2928 = vmatprep.subr.bf16.mxu0 0
    %2929 = vmatpush1.bf16.msra.mxu0 0
    %2930 = vmatprep.subr.bf16.mxu0 0
    %2931 = vmatpush1.bf16.msra.mxu0 0
    %2932 = vmatprep.subr.bf16.mxu0 0
    %2933 = vmatpush1.bf16.msra.mxu0 0
    %2934 = vmatprep.subr.bf16.mxu0 0
    %2935 = vmatpush1.bf16.msra.mxu0 0
    %2936 = vmatprep.subr.bf16.mxu0 0
    %2937 = vmatpush1.bf16.msra.mxu0 0
    %2938 = vmatprep.mubr.bf16.mxu0 0
    %2939 = vmatmul.mubr.bf16.gmra.mrb[0].mxu0 %v1564
    %v2940 = vpop.f32.mrb[0].mxu0
    %v2941 = vadd.f32 %v2900, %v2940
    %v2942 = vpop.f32.mrb[0].mxu0
    %v2943 = vpop.f32.mrb[0].mxu0
    %v2944 = vadd.f32 %v2903, %v2943
    %v2945 = vpop.f32.mrb[0].mxu0
    %2946 = vdwg.mxu0
    %v2947 = vld [vmem:[#allocation19] sm:$0x1]
    %v2949 = vlaneseq
    %v2950 = vshrl.u32 %v2949, 7
    %v2951 = vsub.s32 0, %v2950
    %v2952 = vrot.slane %v2947, %v2951
    %v2954 = vadd.f32 %v2941, %v2952
    %v2955 = vadd.f32 %v2944, %v2952
    %vm2956 = vcmask 15360
    %2957 = vst.msk [vmem:[#allocation20] sm:$0xff] %vm2956, %v2954
    %2958 = vst.msk [vmem:[#allocation20 + $0x8] sm:$0xff] %vm2956, %v2955
    // Predicated region
    $region90: #{critic_forward.1} parent=1 // pred_check
      _
    $region91: #{critic_forward.1} parent=1 // pred_check_branch
      %2960 = sbr.rel (0) target = $region93
    $region92: #{critic_forward.1} parent=1 // pred_region
      %s2962 = ssub.s32 256, 32
      %2963 = vsyncadd [#allocation4], %s2962
      %s2964 = sshll.u32 [#allocation20], 4
      %s2965 = int_to_ptr.vmem [resolvable:$true] %s2964
      %2970 = dma.vmem_to_hbm [thread:$0]  %s2965, 32, %s11, [#allocation4], 32, 32, 2
    $region93: #{critic_forward.1} parent=1 // pred_fallthru
      _
    // Predicated region
    $region94: #{critic_forward.1} parent=1 // pred_check
      _
    $region95: #{critic_forward.1} parent=1 // pred_check_branch
      %2972 = sbr.rel (0) target = $region97
    $region96: #{critic_forward.1} parent=1 // pred_region
      %2973 = dma.done [#allocation4], 256
    $region97: #{critic_forward.1} parent=1 // pred_fallthru
      _
    %2974 = vsyncpa [#allocation3], 1
    %2975 = vsyncpa [#allocation6], 1
    %2976 = vsyncpa [#allocation9], 1
    %2977 = vsyncpa [#allocation12], 1
    %2978 = vsyncpa [#allocation15], 1
    %2979 = vsyncpa [#allocation18], 1
    %2980 = vsyncpa [#allocation4], 1

</llo_original>
